<compile_context>
chip_gen: v7x
topology: tpu7x:2x2x1
jax: 0.10.0
libtpu: 0.0.40
codegen_flags: <defaults>
</compile_context>

<pallas_src>
import jax
import jax.numpy as jnp
from jax.experimental import pallas as pl
from jax.experimental.pallas import tpu as pltpu

LANE = 128      # lane width (last-dim tiling unit)
SUBLANE = 8     # sublane unit (second-to-last dim)

# Per-generation policy: (batch-tile cap, vmem_limit_bytes).
_GEN_POLICY = {
    "v5": (256, 100 * 1024 * 1024),
    "v6": (1024, 100 * 1024 * 1024),
    "v7": (512, 56 * 1024 * 1024),
    None: (512, 64 * 1024 * 1024),
}


def _round_up(n, m):
    return ((n + m - 1) // m) * m


def _pad_to(a, shape):
    pads = [(0, s - d) for d, s in zip(a.shape, shape)]
    if all(p == (0, 0) for p in pads):
        return a
    return jnp.pad(a, pads)


def _tpu_generation():
    try:
        kind = jax.devices()[0].device_kind.lower()
    except Exception:
        return None
    for tag in ("v7", "v6", "v5"):
        if tag in kind:
            return tag
    return None


def _vmem_footprint(tile_b, in_p, h_p, out_p, cbytes):
    """Conservative (double-buffered everywhere) VMEM estimate in bytes."""
    wb = 2 * 3 * h_p * h_p * cbytes + 2 * 3 * h_p * 4      # block weights+biases
    stem_head = 2 * ((in_p * h_p + h_p * out_p) * cbytes + (h_p + out_p) * 4)
    tiles = 2 * tile_b * in_p * cbytes + 2 * tile_b * out_p * 4
    scratch = tile_b * h_p * 4
    return wb + stem_head + tiles + scratch


def resnet_kernel(x_ref, w_in_ref, b_in_ref, wb_ref, bb_ref,
                  w_out_ref, b_out_ref, o_ref, h_ref):
    """One (batch-tile, residual-block) grid step.

    Grid axis 0: batch tiles ("parallel", shards across TensorCores).
    Grid axis 1: residual blocks ("arbitrary"); the activation h lives in the
    f32 VMEM scratch h_ref across the block axis, so only one block's three
    (Hp, Hp) weight matrices are resident (double-buffered) at a time.

    x_ref:    (TB, INp)  compute dtype (bf16)
    w_in_ref: (INp, Hp)  bf16          b_in_ref:  (1, Hp)    f32
    wb_ref:   (1, 3, Hp, Hp) bf16      bb_ref:    (1, 3, 1, Hp) f32
    w_out_ref:(Hp, OUTp) bf16          b_out_ref: (1, OUTp)  f32
    o_ref:    (TB, OUTp)               h_ref:     (TB, Hp)   f32 scratch
    """
    k = pl.program_id(1)
    nblk = pl.num_programs(1)
    cdt = wb_ref.dtype  # bf16 compute dtype for the MXU

    # Stem: Linear + ReLU (only on the first block step of this batch tile).
    @pl.when(k == 0)
    def _stem():
        h0 = jnp.dot(x_ref[...], w_in_ref[...],
                     preferred_element_type=jnp.float32) + b_in_ref[...]
        h_ref[...] = jnp.maximum(h0, 0.0)

    # Residual block k: Linear+ReLU, Linear+ReLU, Linear, +x, ReLU.
    h = h_ref[...]
    t = jnp.dot(h.astype(cdt), wb_ref[0, 0],
                preferred_element_type=jnp.float32) + bb_ref[0, 0]
    t = jnp.maximum(t, 0.0)
    t = jnp.dot(t.astype(cdt), wb_ref[0, 1],
                preferred_element_type=jnp.float32) + bb_ref[0, 1]
    t = jnp.maximum(t, 0.0)
    t = jnp.dot(t.astype(cdt), wb_ref[0, 2],
                preferred_element_type=jnp.float32) + bb_ref[0, 2]
    h = jnp.maximum(t + h, 0.0)
    h_ref[...] = h

    # Head: final Linear, no activation (only on the last block step).
    @pl.when(k == nblk - 1)
    def _head():
        out = jnp.dot(h.astype(cdt), w_out_ref[...],
                      preferred_element_type=jnp.float32) + b_out_ref[...]
        o_ref[...] = out.astype(o_ref.dtype)


def resnet_forward(x, params, *, tile_b=None, compute_dtype=jnp.bfloat16):
    """Run the fused ResNet kernel, tiling over batch and residual blocks."""
    w_in, b_in, wb, bb, w_out, b_out = params
    B, in_dim = x.shape
    hidden = w_in.shape[1]
    out_dim = w_out.shape[1]
    num_blocks = wb.shape[0]
    assert num_blocks >= 1, "kernel expects at least one residual block"

    # Lane-dense padding of feature dims.
    in_p = _round_up(in_dim, LANE)
    h_p = _round_up(hidden, LANE)
    out_p = _round_up(out_dim, LANE)

    gen = _tpu_generation()
    cap, vmem_limit = _GEN_POLICY.get(gen, _GEN_POLICY[None])
    cbytes = jnp.dtype(compute_dtype).itemsize

    if tile_b is None:
        tile_b = min(cap, _round_up(B, SUBLANE))
        if tile_b >= LANE:
            tile_b = _round_up(tile_b, LANE)        # full MXU M passes
        else:
            tile_b = _round_up(tile_b, 2 * SUBLANE)  # bf16 sublane packing
        # v7x megacore: give both TensorCores a batch tile when B is large.
        if gen == "v7" and B >= 2 * LANE and tile_b >= B:
            tile_b = _round_up((B + 1) // 2, LANE)
        # Shrink the batch tile until the working set fits the VMEM budget.
        while tile_b > LANE and _vmem_footprint(
                tile_b, in_p, h_p, out_p, cbytes) > int(0.85 * vmem_limit):
            tile_b = max(LANE, _round_up(tile_b // 2, LANE))
    tile_b = max(SUBLANE, _round_up(tile_b, SUBLANE))
    b_p = _round_up(B, tile_b)
    n_batch_tiles = b_p // tile_b

    # TODO(synk): for h_p >= 2048 on v7x, split the 3 intra-block layers into a
    # third "arbitrary" grid axis so only one (h_p, h_p) weight is resident.

    x_p = _pad_to(x, (b_p, in_p)).astype(compute_dtype)
    w_in_p = _pad_to(w_in, (in_p, h_p)).astype(compute_dtype)
    b_in_p = _pad_to(b_in, (1, h_p)).astype(jnp.float32)
    wb_p = _pad_to(wb, (num_blocks, 3, h_p, h_p)).astype(compute_dtype)
    bb_p = _pad_to(bb, (num_blocks, 3, 1, h_p)).astype(jnp.float32)
    w_out_p = _pad_to(w_out, (h_p, out_p)).astype(compute_dtype)
    b_out_p = _pad_to(b_out, (1, out_p)).astype(jnp.float32)

    flops = 2 * b_p * (in_p * h_p + 3 * num_blocks * h_p * h_p + h_p * out_p)
    weight_bytes = sum(int(a.size) * a.dtype.itemsize for a in
                       (w_in_p, b_in_p, wb_p, bb_p, w_out_p, b_out_p))
    bytes_accessed = (n_batch_tiles * weight_bytes
                      + int(x_p.size) * x_p.dtype.itemsize
                      + b_p * out_p * x.dtype.itemsize)

    def build(single_buffer_const):
        def const_spec(shape):
            nd = len(shape)
            idx = lambda i, k, _nd=nd: (0,) * _nd
            if single_buffer_const:
                # Constant across the whole grid -> double-buffering buys nothing.
                return pl.BlockSpec(shape, idx, pipeline_mode=pl.Buffered(1))
            return pl.BlockSpec(shape, idx)

        grid_spec = pltpu.PrefetchScalarGridSpec(
            num_scalar_prefetch=0,
            grid=(n_batch_tiles, num_blocks),
            in_specs=[
                pl.BlockSpec((tile_b, in_p), lambda i, k: (i, 0)),       # x tile
                const_spec((in_p, h_p)),                                 # w_in
                const_spec((1, h_p)),                                    # b_in
                pl.BlockSpec((1, 3, h_p, h_p),
                             lambda i, k: (k, 0, 0, 0)),                 # block k W
                pl.BlockSpec((1, 3, 1, h_p),
                             lambda i, k: (k, 0, 0, 0)),                 # block k b
                const_spec((h_p, out_p)),                                # w_out
                const_spec((1, out_p)),                                  # b_out
            ],
            out_specs=pl.BlockSpec((tile_b, out_p), lambda i, k: (i, 0)),
            scratch_shapes=[pltpu.VMEM((tile_b, h_p), jnp.float32)],
        )
        return pl.pallas_call(
            resnet_kernel,
            out_shape=jax.ShapeDtypeStruct((b_p, out_p), x.dtype),
            grid_spec=grid_spec,
            compiler_params=pltpu.CompilerParams(
                dimension_semantics=("parallel", "arbitrary"),
                vmem_limit_bytes=int(vmem_limit),
            ),
            cost_estimate=pl.CostEstimate(
                flops=int(flops), transcendentals=0,
                bytes_accessed=int(bytes_accessed)),
        )

    args = (x_p, w_in_p, b_in_p, wb_p, bb_p, w_out_p, b_out_p)
    try:
        out_padded = build(single_buffer_const=True)(*args)
    except Exception:
        # Fall back to default double-buffering if Buffered(1) is unsupported.
        out_padded = build(single_buffer_const=False)(*args)

    return out_padded[:B, :out_dim]


def init_params(key, input_dim, output_dim, hidden_width, num_blocks):
    """Deterministic init mimicking nn.Linear's U(-1/sqrt(fan_in), 1/sqrt(fan_in)).

    Weights are stored already transposed to [in, out]."""
    def linear(k, fan_in, fan_out):
        kw, kb = jax.random.split(k)
        bound = 1.0 / jnp.sqrt(fan_in)
        w = jax.random.uniform(kw, (fan_in, fan_out), jnp.float32, -bound, bound)
        b = jax.random.uniform(kb, (1, fan_out), jnp.float32, -bound, bound)
        return w, b

    keys = jax.random.split(key, 2 + 3 * num_blocks)
    w_in, b_in = linear(keys[0], input_dim, hidden_width)
    wb_list, bb_list = [], []
    for blk in range(num_blocks):
        ws, bs = [], []
        for l in range(3):
            w, b = linear(keys[1 + 3 * blk + l], hidden_width, hidden_width)
            ws.append(w)
            bs.append(b)
        wb_list.append(jnp.stack(ws))                 # (3, H, H)
        bb_list.append(jnp.stack(bs))                 # (3, 1, H)
    wb = jnp.stack(wb_list)                           # (NB, 3, H, H)
    bb = jnp.stack(bb_list)                           # (NB, 3, 1, H)
    w_out, b_out = linear(keys[-1], hidden_width, output_dim)
    return w_in, b_in, wb, bb, w_out, b_out


def resnet_ref(x, params):
    """Pure-JAX f32 reference of the PyTorch forward pass."""
    w_in, b_in, wb, bb, w_out, b_out = params
    h = jnp.maximum(x @ w_in + b_in, 0.0)
    for blk in range(wb.shape[0]):
        t = jnp.maximum(h @ wb[blk, 0] + bb[blk, 0], 0.0)
        t = jnp.maximum(t @ wb[blk, 1] + bb[blk, 1], 0.0)
        t = t @ wb[blk, 2] + bb[blk, 2]
        h = jnp.maximum(t + h, 0.0)
    return h @ w_out + b_out


if __name__ == "__main__":
    INPUT_DIM = 32
    OUTPUT_DIM = 16
    HIDDEN = 32
    NUM_BLOCKS = 2
    BATCH = 16

    key = jax.random.PRNGKey(0)
    kx, kp = jax.random.split(key)
    x = jax.random.normal(kx, (BATCH, INPUT_DIM), jnp.float32)
    params = init_params(kp, INPUT_DIM, OUTPUT_DIM, HIDDEN, NUM_BLOCKS)

    out = resnet_forward(x, params)           # bf16 MXU inputs, f32 accumulate
    out = jax.block_until_ready(out)

    ref = resnet_ref(x, params)
    assert out.shape == (BATCH, OUTPUT_DIM)
    # bf16 weights/activations on the MXU => relaxed tolerance vs f32 reference.
    assert jnp.allclose(out, ref, atol=5e-2, rtol=5e-2), "mismatch vs JAX reference"
    print("KERNEL_OK")
</pallas_src>

<mosaic_0001>
module attributes {stable_mosaic.version = 11 : i64} {
  func.func @resnet_kernel(%arg0: i32, %arg1: i32, %arg2: memref<16x128xbf16, #tpu.memory_space<vmem>>, %arg3: memref<128x128xbf16, #tpu.memory_space<vmem>>, %arg4: memref<1x128xf32, #tpu.memory_space<vmem>>, %arg5: memref<1x3x128x128xbf16, #tpu.memory_space<vmem>>, %arg6: memref<1x3x1x128xf32, #tpu.memory_space<vmem>>, %arg7: memref<128x128xbf16, #tpu.memory_space<vmem>>, %arg8: memref<1x128xf32, #tpu.memory_space<vmem>>, %arg9: memref<16x128xf32, #tpu.memory_space<vmem>>, %arg10: memref<16x128xf32, #tpu.memory_space<vmem>>) attributes {dimension_semantics = [#tpu.dimension_semantics<parallel>, #tpu.dimension_semantics<arbitrary>], iteration_bounds = array<i64: 1, 2>, scalar_prefetch = 0 : i64, scratch_operands = 1 : i64, tpu.core_type = #tpu.core_type<tc>, window_params = [{transform_indices = @transform_0, window_bounds = array<i64: 16, 128>}, {pipeline_mode = #tpu.pipeline_mode<synchronous>, transform_indices = @transform_1, window_bounds = array<i64: 128, 128>}, {pipeline_mode = #tpu.pipeline_mode<synchronous>, transform_indices = @transform_2, window_bounds = array<i64: 1, 128>}, {transform_indices = @transform_3, window_bounds = array<i64: 1, 3, 128, 128>}, {transform_indices = @transform_4, window_bounds = array<i64: 1, 3, 1, 128>}, {pipeline_mode = #tpu.pipeline_mode<synchronous>, transform_indices = @transform_5, window_bounds = array<i64: 128, 128>}, {pipeline_mode = #tpu.pipeline_mode<synchronous>, transform_indices = @transform_6, window_bounds = array<i64: 1, 128>}, {transform_indices = @transform_7, window_bounds = array<i64: 16, 128>}]} {
    %c0_i32 = arith.constant 0 : i32
    %0 = arith.cmpi eq, %arg1, %c0_i32 : i32
    %1 = arith.extui %0 : i1 to i32
    %c0_i32_0 = arith.constant 0 : i32
    %2 = arith.cmpi ne, %1, %c0_i32_0 : i32
    scf.if %2 {
      %c0_32 = arith.constant 0 : index
      %c0_33 = arith.constant 0 : index
      %39 = vector.load %arg2[%c0_32, %c0_33] : memref<16x128xbf16, #tpu.memory_space<vmem>>, vector<16x128xbf16>
      %c0_34 = arith.constant 0 : index
      %c0_35 = arith.constant 0 : index
      %40 = vector.load %arg3[%c0_34, %c0_35] : memref<128x128xbf16, #tpu.memory_space<vmem>>, vector<128x128xbf16>
      %cst_36 = arith.constant dense<0.000000e+00> : vector<16x128xf32>
      %41 = tpu.matmul %39, %40, %cst_36 {dimension_numbers = #tpu.dot_dimension_numbers<[1], [0], [0], [1], [0, 0, 1, 1], [], []>} : vector<16x128xbf16>, vector<128x128xbf16>, vector<16x128xf32> -> vector<16x128xf32>
      %c0_37 = arith.constant 0 : index
      %c0_38 = arith.constant 0 : index
      %42 = vector.load %arg4[%c0_37, %c0_38] : memref<1x128xf32, #tpu.memory_space<vmem>>, vector<1x128xf32>
      %43 = vector.broadcast %42 : vector<1x128xf32> to vector<16x128xf32>
      %44 = arith.addf %41, %43 : vector<16x128xf32>
      %cst_39 = arith.constant 0.000000e+00 : f32
      %45 = vector.broadcast %cst_39 : f32 to vector<16x128xf32>
      %46 = arith.maximumf %44, %45 : vector<16x128xf32>
      %c0_40 = arith.constant 0 : index
      %c0_41 = arith.constant 0 : index
      %47 = vector.load %arg10[%c0_40, %c0_41] : memref<16x128xf32, #tpu.memory_space<vmem>>, vector<16x128xf32>
      tpu.vector_store %arg10[%c0_40, %c0_41], %46 {strides = array<i32>} : memref<16x128xf32, #tpu.memory_space<vmem>>, vector<16x128xf32>,
    } else {
    }
    %c0 = arith.constant 0 : index
    %c0_1 = arith.constant 0 : index
    %3 = vector.load %arg10[%c0, %c0_1] : memref<16x128xf32, #tpu.memory_space<vmem>>, vector<16x128xf32>
    %4 = arith.truncf %3 : vector<16x128xf32> to vector<16x128xbf16>
    %c0_2 = arith.constant 0 : index
    %c0_3 = arith.constant 0 : index
    %c0_4 = arith.constant 0 : index
    %c0_5 = arith.constant 0 : index
    %5 = vector.load %arg5[%c0_2, %c0_3, %c0_4, %c0_5] : memref<1x3x128x128xbf16, #tpu.memory_space<vmem>>, vector<1x1x128x128xbf16>
    %6 = vector.shape_cast %5 : vector<1x1x128x128xbf16> to vector<128x128xbf16>
    %cst = arith.constant dense<0.000000e+00> : vector<16x128xf32>
    %7 = tpu.matmul %4, %6, %cst {dimension_numbers = #tpu.dot_dimension_numbers<[1], [0], [0], [1], [0, 0, 1, 1], [], []>} : vector<16x128xbf16>, vector<128x128xbf16>, vector<16x128xf32> -> vector<16x128xf32>
    %c0_6 = arith.constant 0 : index
    %c0_7 = arith.constant 0 : index
    %c0_8 = arith.constant 0 : index
    %c0_9 = arith.constant 0 : index
    %8 = vector.load %arg6[%c0_6, %c0_7, %c0_8, %c0_9] : memref<1x3x1x128xf32, #tpu.memory_space<vmem>>, vector<1x1x1x128xf32>
    %9 = vector.shape_cast %8 : vector<1x1x1x128xf32> to vector<1x128xf32>
    %10 = vector.broadcast %9 : vector<1x128xf32> to vector<16x128xf32>
    %11 = arith.addf %7, %10 : vector<16x128xf32>
    %cst_10 = arith.constant 0.000000e+00 : f32
    %12 = vector.broadcast %cst_10 : f32 to vector<16x128xf32>
    %13 = arith.maximumf %11, %12 : vector<16x128xf32>
    %14 = arith.truncf %13 : vector<16x128xf32> to vector<16x128xbf16>
    %c0_11 = arith.constant 0 : index
    %c1 = arith.constant 1 : index
    %c0_12 = arith.constant 0 : index
    %c0_13 = arith.constant 0 : index
    %15 = vector.load %arg5[%c0_11, %c1, %c0_12, %c0_13] : memref<1x3x128x128xbf16, #tpu.memory_space<vmem>>, vector<1x1x128x128xbf16>
    %16 = vector.shape_cast %15 : vector<1x1x128x128xbf16> to vector<128x128xbf16>
    %cst_14 = arith.constant dense<0.000000e+00> : vector<16x128xf32>
    %17 = tpu.matmul %14, %16, %cst_14 {dimension_numbers = #tpu.dot_dimension_numbers<[1], [0], [0], [1], [0, 0, 1, 1], [], []>} : vector<16x128xbf16>, vector<128x128xbf16>, vector<16x128xf32> -> vector<16x128xf32>
    %c0_15 = arith.constant 0 : index
    %c1_16 = arith.constant 1 : index
    %c0_17 = arith.constant 0 : index
    %c0_18 = arith.constant 0 : index
    %18 = vector.load %arg6[%c0_15, %c1_16, %c0_17, %c0_18] : memref<1x3x1x128xf32, #tpu.memory_space<vmem>>, vector<1x1x1x128xf32>
    %19 = vector.shape_cast %18 : vector<1x1x1x128xf32> to vector<1x128xf32>
    %20 = vector.broadcast %19 : vector<1x128xf32> to vector<16x128xf32>
    %21 = arith.addf %17, %20 : vector<16x128xf32>
    %cst_19 = arith.constant 0.000000e+00 : f32
    %22 = vector.broadcast %cst_19 : f32 to vector<16x128xf32>
    %23 = arith.maximumf %21, %22 : vector<16x128xf32>
    %24 = arith.truncf %23 : vector<16x128xf32> to vector<16x128xbf16>
    %c0_20 = arith.constant 0 : index
    %c2 = arith.constant 2 : index
    %c0_21 = arith.constant 0 : index
    %c0_22 = arith.constant 0 : index
    %25 = vector.load %arg5[%c0_20, %c2, %c0_21, %c0_22] : memref<1x3x128x128xbf16, #tpu.memory_space<vmem>>, vector<1x1x128x128xbf16>
    %26 = vector.shape_cast %25 : vector<1x1x128x128xbf16> to vector<128x128xbf16>
    %cst_23 = arith.constant dense<0.000000e+00> : vector<16x128xf32>
    %27 = tpu.matmul %24, %26, %cst_23 {dimension_numbers = #tpu.dot_dimension_numbers<[1], [0], [0], [1], [0, 0, 1, 1], [], []>} : vector<16x128xbf16>, vector<128x128xbf16>, vector<16x128xf32> -> vector<16x128xf32>
    %c0_24 = arith.constant 0 : index
    %c2_25 = arith.constant 2 : index
    %c0_26 = arith.constant 0 : index
    %c0_27 = arith.constant 0 : index
    %28 = vector.load %arg6[%c0_24, %c2_25, %c0_26, %c0_27] : memref<1x3x1x128xf32, #tpu.memory_space<vmem>>, vector<1x1x1x128xf32>
    %29 = vector.shape_cast %28 : vector<1x1x1x128xf32> to vector<1x128xf32>
    %30 = vector.broadcast %29 : vector<1x128xf32> to vector<16x128xf32>
    %31 = arith.addf %27, %30 : vector<16x128xf32>
    %32 = arith.addf %31, %3 : vector<16x128xf32>
    %cst_28 = arith.constant 0.000000e+00 : f32
    %33 = vector.broadcast %cst_28 : f32 to vector<16x128xf32>
    %34 = arith.maximumf %32, %33 : vector<16x128xf32>
    %c0_29 = arith.constant 0 : index
    %c0_30 = arith.constant 0 : index
    %35 = vector.load %arg10[%c0_29, %c0_30] : memref<16x128xf32, #tpu.memory_space<vmem>>, vector<16x128xf32>
    tpu.vector_store %arg10[%c0_29, %c0_30], %34 {strides = array<i32>} : memref<16x128xf32, #tpu.memory_space<vmem>>, vector<16x128xf32>,
    %c1_i32 = arith.constant 1 : i32
    %36 = arith.cmpi eq, %arg1, %c1_i32 : i32
    %37 = arith.extui %36 : i1 to i32
    %c0_i32_31 = arith.constant 0 : i32
    %38 = arith.cmpi ne, %37, %c0_i32_31 : i32
    scf.if %38 {
      %39 = arith.truncf %34 : vector<16x128xf32> to vector<16x128xbf16>
      %c0_32 = arith.constant 0 : index
      %c0_33 = arith.constant 0 : index
      %40 = vector.load %arg7[%c0_32, %c0_33] : memref<128x128xbf16, #tpu.memory_space<vmem>>, vector<128x128xbf16>
      %cst_34 = arith.constant dense<0.000000e+00> : vector<16x128xf32>
      %41 = tpu.matmul %39, %40, %cst_34 {dimension_numbers = #tpu.dot_dimension_numbers<[1], [0], [0], [1], [0, 0, 1, 1], [], []>} : vector<16x128xbf16>, vector<128x128xbf16>, vector<16x128xf32> -> vector<16x128xf32>
      %c0_35 = arith.constant 0 : index
      %c0_36 = arith.constant 0 : index
      %42 = vector.load %arg8[%c0_35, %c0_36] : memref<1x128xf32, #tpu.memory_space<vmem>>, vector<1x128xf32>
      %43 = vector.broadcast %42 : vector<1x128xf32> to vector<16x128xf32>
      %44 = arith.addf %41, %43 : vector<16x128xf32>
      %c0_37 = arith.constant 0 : index
      %c0_38 = arith.constant 0 : index
      %45 = vector.load %arg9[%c0_37, %c0_38] : memref<16x128xf32, #tpu.memory_space<vmem>>, vector<16x128xf32>
      tpu.vector_store %arg9[%c0_37, %c0_38], %44 {strides = array<i32>} : memref<16x128xf32, #tpu.memory_space<vmem>>, vector<16x128xf32>,
    } else {
    }
    return
  }
  func.func @transform_0(%arg0: i32, %arg1: i32) -> (i32, i32) {
    %c0_i32 = arith.constant 0 : i32
    %c0_i32_0 = arith.constant 0 : i32
    return %arg0, %c0_i32 : i32, i32
  }
  func.func @transform_1(%arg0: i32, %arg1: i32) -> (i32, i32) {
    %c0_i32 = arith.constant 0 : i32
    %c0_i32_0 = arith.constant 0 : i32
    %c0_i32_1 = arith.constant 0 : i32
    return %c0_i32, %c0_i32_0 : i32, i32
  }
  func.func @transform_2(%arg0: i32, %arg1: i32) -> (i32, i32) {
    %c0_i32 = arith.constant 0 : i32
    %c0_i32_0 = arith.constant 0 : i32
    %c0_i32_1 = arith.constant 0 : i32
    return %c0_i32, %c0_i32_0 : i32, i32
  }
  func.func @transform_3(%arg0: i32, %arg1: i32) -> (i32, i32, i32, i32) {
    %c0_i32 = arith.constant 0 : i32
    %c0_i32_0 = arith.constant 0 : i32
    %c0_i32_1 = arith.constant 0 : i32
    %c0_i32_2 = arith.constant 0 : i32
    return %arg1, %c0_i32, %c0_i32_0, %c0_i32_1 : i32, i32, i32, i32
  }
  func.func @transform_4(%arg0: i32, %arg1: i32) -> (i32, i32, i32, i32) {
    %c0_i32 = arith.constant 0 : i32
    %c0_i32_0 = arith.constant 0 : i32
    %c0_i32_1 = arith.constant 0 : i32
    %c0_i32_2 = arith.constant 0 : i32
    return %arg1, %c0_i32, %c0_i32_0, %c0_i32_1 : i32, i32, i32, i32
  }
  func.func @transform_5(%arg0: i32, %arg1: i32) -> (i32, i32) {
    %c0_i32 = arith.constant 0 : i32
    %c0_i32_0 = arith.constant 0 : i32
    %c0_i32_1 = arith.constant 0 : i32
    return %c0_i32, %c0_i32_0 : i32, i32
  }
  func.func @transform_6(%arg0: i32, %arg1: i32) -> (i32, i32) {
    %c0_i32 = arith.constant 0 : i32
    %c0_i32_0 = arith.constant 0 : i32
    %c0_i32_1 = arith.constant 0 : i32
    return %c0_i32, %c0_i32_0 : i32, i32
  }
  func.func @transform_7(%arg0: i32, %arg1: i32) -> (i32, i32) {
    %c0_i32 = arith.constant 0 : i32
    %c0_i32_0 = arith.constant 0 : i32
    return %arg0, %c0_i32 : i32, i32
  }
}

module attributes {stable_mosaic.version = 11 : i64} {
  func.func @resnet_kernel(%arg0: i32, %arg1: i32, %arg2: memref<16x128xbf16, #tpu.memory_space<vmem>>, %arg3: memref<128x128xbf16, #tpu.memory_space<vmem>>, %arg4: memref<1x128xf32, #tpu.memory_space<vmem>>, %arg5: memref<1x3x128x128xbf16, #tpu.memory_space<vmem>>, %arg6: memref<1x3x1x128xf32, #tpu.memory_space<vmem>>, %arg7: memref<128x128xbf16, #tpu.memory_space<vmem>>, %arg8: memref<1x128xf32, #tpu.memory_space<vmem>>, %arg9: memref<16x128xf32, #tpu.memory_space<vmem>>, %arg10: memref<16x128xf32, #tpu.memory_space<vmem>>) attributes {dimension_semantics = [#tpu.dimension_semantics<parallel>, #tpu.dimension_semantics<arbitrary>], iteration_bounds = array<i64: 1, 2>, scalar_prefetch = 0 : i64, scratch_operands = 1 : i64, tpu.core_type = #tpu.core_type<tc>, window_params = [{transform_indices = @transform_0, window_bounds = array<i64: 16, 128>}, {pipeline_mode = #tpu.pipeline_mode<synchronous>, transform_indices = @transform_1, window_bounds = array<i64: 128, 128>}, {pipeline_mode = #tpu.pipeline_mode<synchronous>, transform_indices = @transform_2, window_bounds = array<i64: 1, 128>}, {transform_indices = @transform_3, window_bounds = array<i64: 1, 3, 128, 128>}, {transform_indices = @transform_4, window_bounds = array<i64: 1, 3, 1, 128>}, {pipeline_mode = #tpu.pipeline_mode<synchronous>, transform_indices = @transform_5, window_bounds = array<i64: 128, 128>}, {pipeline_mode = #tpu.pipeline_mode<synchronous>, transform_indices = @transform_6, window_bounds = array<i64: 1, 128>}, {transform_indices = @transform_7, window_bounds = array<i64: 16, 128>}]} {
    %c0_i32 = arith.constant 0 : i32
    %0 = arith.cmpi eq, %arg1, %c0_i32 : i32
    %1 = arith.extui %0 : i1 to i32
    %c0_i32_0 = arith.constant 0 : i32
    %2 = arith.cmpi ne, %1, %c0_i32_0 : i32
    scf.if %2 {
      %c0_32 = arith.constant 0 : index
      %c0_33 = arith.constant 0 : index
      %39 = vector.load %arg2[%c0_32, %c0_33] : memref<16x128xbf16, #tpu.memory_space<vmem>>, vector<16x128xbf16>
      %c0_34 = arith.constant 0 : index
      %c0_35 = arith.constant 0 : index
      %40 = vector.load %arg3[%c0_34, %c0_35] : memref<128x128xbf16, #tpu.memory_space<vmem>>, vector<128x128xbf16>
      %cst_36 = arith.constant dense<0.000000e+00> : vector<16x128xf32>
      %41 = tpu.matmul %39, %40, %cst_36 {dimension_numbers = #tpu.dot_dimension_numbers<[1], [0], [0], [1], [0, 0, 1, 1], [], []>} : vector<16x128xbf16>, vector<128x128xbf16>, vector<16x128xf32> -> vector<16x128xf32>
      %c0_37 = arith.constant 0 : index
      %c0_38 = arith.constant 0 : index
      %42 = vector.load %arg4[%c0_37, %c0_38] : memref<1x128xf32, #tpu.memory_space<vmem>>, vector<1x128xf32>
      %43 = vector.broadcast %42 : vector<1x128xf32> to vector<16x128xf32>
      %44 = arith.addf %41, %43 : vector<16x128xf32>
      %cst_39 = arith.constant 0.000000e+00 : f32
      %45 = vector.broadcast %cst_39 : f32 to vector<16x128xf32>
      %46 = arith.maximumf %44, %45 : vector<16x128xf32>
      %c0_40 = arith.constant 0 : index
      %c0_41 = arith.constant 0 : index
      %47 = vector.load %arg10[%c0_40, %c0_41] : memref<16x128xf32, #tpu.memory_space<vmem>>, vector<16x128xf32>
      tpu.vector_store %arg10[%c0_40, %c0_41], %46 {strides = array<i32>} : memref<16x128xf32, #tpu.memory_space<vmem>>, vector<16x128xf32>,
    } else {
    }
    %c0 = arith.constant 0 : index
    %c0_1 = arith.constant 0 : index
    %3 = vector.load %arg10[%c0, %c0_1] : memref<16x128xf32, #tpu.memory_space<vmem>>, vector<16x128xf32>
    %4 = arith.truncf %3 : vector<16x128xf32> to vector<16x128xbf16>
    %c0_2 = arith.constant 0 : index
    %c0_3 = arith.constant 0 : index
    %c0_4 = arith.constant 0 : index
    %c0_5 = arith.constant 0 : index
    %5 = vector.load %arg5[%c0_2, %c0_3, %c0_4, %c0_5] : memref<1x3x128x128xbf16, #tpu.memory_space<vmem>>, vector<1x1x128x128xbf16>
    %6 = vector.shape_cast %5 : vector<1x1x128x128xbf16> to vector<128x128xbf16>
    %cst = arith.constant dense<0.000000e+00> : vector<16x128xf32>
    %7 = tpu.matmul %4, %6, %cst {dimension_numbers = #tpu.dot_dimension_numbers<[1], [0], [0], [1], [0, 0, 1, 1], [], []>} : vector<16x128xbf16>, vector<128x128xbf16>, vector<16x128xf32> -> vector<16x128xf32>
    %c0_6 = arith.constant 0 : index
    %c0_7 = arith.constant 0 : index
    %c0_8 = arith.constant 0 : index
    %c0_9 = arith.constant 0 : index
    %8 = vector.load %arg6[%c0_6, %c0_7, %c0_8, %c0_9] : memref<1x3x1x128xf32, #tpu.memory_space<vmem>>, vector<1x1x1x128xf32>
    %9 = vector.shape_cast %8 : vector<1x1x1x128xf32> to vector<1x128xf32>
    %10 = vector.broadcast %9 : vector<1x128xf32> to vector<16x128xf32>
    %11 = arith.addf %7, %10 : vector<16x128xf32>
    %cst_10 = arith.constant 0.000000e+00 : f32
    %12 = vector.broadcast %cst_10 : f32 to vector<16x128xf32>
    %13 = arith.maximumf %11, %12 : vector<16x128xf32>
    %14 = arith.truncf %13 : vector<16x128xf32> to vector<16x128xbf16>
    %c0_11 = arith.constant 0 : index
    %c1 = arith.constant 1 : index
    %c0_12 = arith.constant 0 : index
    %c0_13 = arith.constant 0 : index
    %15 = vector.load %arg5[%c0_11, %c1, %c0_12, %c0_13] : memref<1x3x128x128xbf16, #tpu.memory_space<vmem>>, vector<1x1x128x128xbf16>
    %16 = vector.shape_cast %15 : vector<1x1x128x128xbf16> to vector<128x128xbf16>
    %cst_14 = arith.constant dense<0.000000e+00> : vector<16x128xf32>
    %17 = tpu.matmul %14, %16, %cst_14 {dimension_numbers = #tpu.dot_dimension_numbers<[1], [0], [0], [1], [0, 0, 1, 1], [], []>} : vector<16x128xbf16>, vector<128x128xbf16>, vector<16x128xf32> -> vector<16x128xf32>
    %c0_15 = arith.constant 0 : index
    %c1_16 = arith.constant 1 : index
    %c0_17 = arith.constant 0 : index
    %c0_18 = arith.constant 0 : index
    %18 = vector.load %arg6[%c0_15, %c1_16, %c0_17, %c0_18] : memref<1x3x1x128xf32, #tpu.memory_space<vmem>>, vector<1x1x1x128xf32>
    %19 = vector.shape_cast %18 : vector<1x1x1x128xf32> to vector<1x128xf32>
    %20 = vector.broadcast %19 : vector<1x128xf32> to vector<16x128xf32>
    %21 = arith.addf %17, %20 : vector<16x128xf32>
    %cst_19 = arith.constant 0.000000e+00 : f32
    %22 = vector.broadcast %cst_19 : f32 to vector<16x128xf32>
    %23 = arith.maximumf %21, %22 : vector<16x128xf32>
    %24 = arith.truncf %23 : vector<16x128xf32> to vector<16x128xbf16>
    %c0_20 = arith.constant 0 : index
    %c2 = arith.constant 2 : index
    %c0_21 = arith.constant 0 : index
    %c0_22 = arith.constant 0 : index
    %25 = vector.load %arg5[%c0_20, %c2, %c0_21, %c0_22] : memref<1x3x128x128xbf16, #tpu.memory_space<vmem>>, vector<1x1x128x128xbf16>
    %26 = vector.shape_cast %25 : vector<1x1x128x128xbf16> to vector<128x128xbf16>
    %cst_23 = arith.constant dense<0.000000e+00> : vector<16x128xf32>
    %27 = tpu.matmul %24, %26, %cst_23 {dimension_numbers = #tpu.dot_dimension_numbers<[1], [0], [0], [1], [0, 0, 1, 1], [], []>} : vector<16x128xbf16>, vector<128x128xbf16>, vector<16x128xf32> -> vector<16x128xf32>
    %c0_24 = arith.constant 0 : index
    %c2_25 = arith.constant 2 : index
    %c0_26 = arith.constant 0 : index
    %c0_27 = arith.constant 0 : index
    %28 = vector.load %arg6[%c0_24, %c2_25, %c0_26, %c0_27] : memref<1x3x1x128xf32, #tpu.memory_space<vmem>>, vector<1x1x1x128xf32>
    %29 = vector.shape_cast %28 : vector<1x1x1x128xf32> to vector<1x128xf32>
    %30 = vector.broadcast %29 : vector<1x128xf32> to vector<16x128xf32>
    %31 = arith.addf %27, %30 : vector<16x128xf32>
    %32 = arith.addf %31, %3 : vector<16x128xf32>
    %cst_28 = arith.constant 0.000000e+00 : f32
    %33 = vector.broadcast %cst_28 : f32 to vector<16x128xf32>
    %34 = arith.maximumf %32, %33 : vector<16x128xf32>
    %c0_29 = arith.constant 0 : index
    %c0_30 = arith.constant 0 : index
    %35 = vector.load %arg10[%c0_29, %c0_30] : memref<16x128xf32, #tpu.memory_space<vmem>>, vector<16x128xf32>
    tpu.vector_store %arg10[%c0_29, %c0_30], %34 {strides = array<i32>} : memref<16x128xf32, #tpu.memory_space<vmem>>, vector<16x128xf32>,
    %c1_i32 = arith.constant 1 : i32
    %36 = arith.cmpi eq, %arg1, %c1_i32 : i32
    %37 = arith.extui %36 : i1 to i32
    %c0_i32_31 = arith.constant 0 : i32
    %38 = arith.cmpi ne, %37, %c0_i32_31 : i32
    scf.if %38 {
      %39 = arith.truncf %34 : vector<16x128xf32> to vector<16x128xbf16>
      %c0_32 = arith.constant 0 : index
      %c0_33 = arith.constant 0 : index
      %40 = vector.load %arg7[%c0_32, %c0_33] : memref<128x128xbf16, #tpu.memory_space<vmem>>, vector<128x128xbf16>
      %cst_34 = arith.constant dense<0.000000e+00> : vector<16x128xf32>
      %41 = tpu.matmul %39, %40, %cst_34 {dimension_numbers = #tpu.dot_dimension_numbers<[1], [0], [0], [1], [0, 0, 1, 1], [], []>} : vector<16x128xbf16>, vector<128x128xbf16>, vector<16x128xf32> -> vector<16x128xf32>
      %c0_35 = arith.constant 0 : index
      %c0_36 = arith.constant 0 : index
      %42 = vector.load %arg8[%c0_35, %c0_36] : memref<1x128xf32, #tpu.memory_space<vmem>>, vector<1x128xf32>
      %43 = vector.broadcast %42 : vector<1x128xf32> to vector<16x128xf32>
      %44 = arith.addf %41, %43 : vector<16x128xf32>
      %c0_37 = arith.constant 0 : index
      %c0_38 = arith.constant 0 : index
      %45 = vector.load %arg9[%c0_37, %c0_38] : memref<16x128xf32, #tpu.memory_space<vmem>>, vector<16x128xf32>
      tpu.vector_store %arg9[%c0_37, %c0_38], %44 {strides = array<i32>} : memref<16x128xf32, #tpu.memory_space<vmem>>, vector<16x128xf32>,
    } else {
    }
    return
  }
  func.func @transform_0(%arg0: i32, %arg1: i32) -> (i32, i32) {
    %c0_i32 = arith.constant 0 : i32
    %c0_i32_0 = arith.constant 0 : i32
    return %arg0, %c0_i32 : i32, i32
  }
  func.func @transform_1(%arg0: i32, %arg1: i32) -> (i32, i32) {
    %c0_i32 = arith.constant 0 : i32
    %c0_i32_0 = arith.constant 0 : i32
    %c0_i32_1 = arith.constant 0 : i32
    return %c0_i32, %c0_i32_0 : i32, i32
  }
  func.func @transform_2(%arg0: i32, %arg1: i32) -> (i32, i32) {
    %c0_i32 = arith.constant 0 : i32
    %c0_i32_0 = arith.constant 0 : i32
    %c0_i32_1 = arith.constant 0 : i32
    return %c0_i32, %c0_i32_0 : i32, i32
  }
  func.func @transform_3(%arg0: i32, %arg1: i32) -> (i32, i32, i32, i32) {
    %c0_i32 = arith.constant 0 : i32
    %c0_i32_0 = arith.constant 0 : i32
    %c0_i32_1 = arith.constant 0 : i32
    %c0_i32_2 = arith.constant 0 : i32
    return %arg1, %c0_i32, %c0_i32_0, %c0_i32_1 : i32, i32, i32, i32
  }
  func.func @transform_4(%arg0: i32, %arg1: i32) -> (i32, i32, i32, i32) {
    %c0_i32 = arith.constant 0 : i32
    %c0_i32_0 = arith.constant 0 : i32
    %c0_i32_1 = arith.constant 0 : i32
    %c0_i32_2 = arith.constant 0 : i32
    return %arg1, %c0_i32, %c0_i32_0, %c0_i32_1 : i32, i32, i32, i32
  }
  func.func @transform_5(%arg0: i32, %arg1: i32) -> (i32, i32) {
    %c0_i32 = arith.constant 0 : i32
    %c0_i32_0 = arith.constant 0 : i32
    %c0_i32_1 = arith.constant 0 : i32
    return %c0_i32, %c0_i32_0 : i32, i32
  }
  func.func @transform_6(%arg0: i32, %arg1: i32) -> (i32, i32) {
    %c0_i32 = arith.constant 0 : i32
    %c0_i32_0 = arith.constant 0 : i32
    %c0_i32_1 = arith.constant 0 : i32
    return %c0_i32, %c0_i32_0 : i32, i32
  }
  func.func @transform_7(%arg0: i32, %arg1: i32) -> (i32, i32) {
    %c0_i32 = arith.constant 0 : i32
    %c0_i32_0 = arith.constant 0 : i32
    return %arg0, %c0_i32 : i32, i32
  }
}

</mosaic_0001>

<llo_original>
// kernel: tpu_custom_call.1
$region0: #{tpu_custom_call.1}
  #allocation0 [shape = 'u32[]', space=smem, size = 0x4, offset = 0x4, fixed_abs, tag = 'smem constant byte address 0x4 - core index']
  #allocation1 [shape = 'u32[144,128]{1,0:T(1,128)}', space=vmem, size = 0x12000, scoped, tag = 'internal scratch']
  #allocation2 [shape = 'f32[16,128]{1,0:T(8,128)}', space=vmem, size = 0x2000, scoped, tag = 'scratch operand']
  %s0 = inlined_call_operand.hbm [shape: bf16[16,128], index: 0, kind: input, shape index: {}]
  %s1 = inlined_call_operand.hbm [shape: bf16[128,128], index: 1, kind: input, shape index: {}]
  %s2 = inlined_call_operand.hbm [shape: f32[1,128], index: 2, kind: input, shape index: {}]
  %s3 = inlined_call_operand.hbm [shape: bf16[2,3,128,128], index: 3, kind: input, shape index: {}]
  %s4 = inlined_call_operand.hbm [shape: f32[2,3,1,128], index: 4, kind: input, shape index: {}]
  %s5 = inlined_call_operand.hbm [shape: bf16[128,128], index: 5, kind: input, shape index: {}]
  %s6 = inlined_call_operand.hbm [shape: f32[1,128], index: 6, kind: input, shape index: {}]
  %s7 = inlined_call_operand.hbm [shape: f32[16,128], index: 7, kind: output, shape index: {}]
  %s8 = sld [smem:[#allocation0]]
  $region97: #{tpu_custom_call.1} parent=0
    _
  %s10 = ssub.s32 1, %s8
  %s11 = scalar_select 0, %s10, %s8
  $region1: #{tpu_custom_call.1} parent=0
    #allocation3 [shape = 'u8[4096]{0}', space=vmem, size = 0x1000, scoped, tag = 'input window, operand 0, single buffered']
    #allocation4 [shape = 's32[2]{0}', space=sflag, size = 0x8, scoped, tag = 'scoped memory for tpu_custom_call.1']
    #allocation5 [shape = 's32[2]{0}', space=sflag, size = 0x8, scoped, tag = 'scoped memory for tpu_custom_call.1']
    #allocation6 [shape = 'u8[32768]{0}', space=vmem, size = 0x8000, scoped, tag = 'input window, operand 1, single buffered']
    #allocation7 [shape = 's32[1]{0}', space=sflag, size = 0x4, scoped, tag = 'scoped memory for tpu_custom_call.1']
    #allocation8 [shape = 'u8[512]{0}', space=vmem, size = 0x400, scoped, tag = 'input window, operand 2, single buffered']
    #allocation9 [shape = 'u8[196608]{0}', space=vmem, size = 0x30000, scoped, tag = 'input window, operand 3']
    #allocation10 [shape = 's32[2]{0}', space=sflag, size = 0x8, scoped, tag = 'scoped memory for tpu_custom_call.1']
    #allocation11 [shape = 'u8[3072]{0}', space=vmem, size = 0xc00, scoped, tag = 'input window, operand 4']
    #allocation12 [shape = 'u8[32768]{0}', space=vmem, size = 0x8000, scoped, tag = 'input window, operand 5, single buffered']
    #allocation13 [shape = 's32[1]{0}', space=sflag, size = 0x4, scoped, tag = 'scoped memory for tpu_custom_call.1']
    #allocation14 [shape = 'u8[512]{0}', space=vmem, size = 0x400, scoped, tag = 'input window, operand 6, single buffered']
    #allocation15 [shape = 'u8[8192]{0}', space=vmem, size = 0x2000, scoped, tag = 'output window, operand 0, single buffered']
    %12 = vsyncpa [#allocation4], 0
    %13 = vsyncpa [#allocation7], 0
    %14 = vsyncpa [#allocation10], 0
    %s15 = scalar_lea.sflag [#allocation10], 1
    %16 = vsyncpa %s15, 0
    %17 = vsyncpa [#allocation13], 0
    %18 = vsyncpa [#allocation5], 0
    loop: start=0, step=1, limit=4
    $region2: #{tpu_custom_call.1} parent=1 // loop_pre_header
      _
    $region3: #{tpu_custom_call.1} parent=1 // loop_header
      %s20 = sphi 0, %s24
      %p21 = scmp.ge.s32.totalorder %s20, 4
      %s27 = sphi 0, %s39
      %s28 = sphi 0, %s35
      %s29 = sphi 0, %s27
      %s30 = sphi 0, %s28
      %s31 = sphi 0, %s29
      %s32 = sphi 0, %s30
      %s42 = sphi 0, %s44
      %s45 = sphi 0, %s42
      %s46 = sphi 0, %s45
      %s62 = sphi 0, %s46
      %s66 = sphi 0, %s66
      %s68 = sphi 0, %s66
      %s69 = sphi 0, %s68
      %s83 = sphi 0, %s69
      %s87 = sphi 0, %s87
      %s89 = sphi 0, %s87
      %s90 = sphi 0, %s89
      %s104 = sphi 0, %s90
      %s110 = sphi 0, %s112
      %s113 = sphi 0, %s110
      %s114 = sphi 0, %s113
      %s130 = sphi 0, %s114
      %s136 = sphi 0, %s138
      %s139 = sphi 0, %s136
      %s140 = sphi 0, %s139
      %s156 = sphi 0, %s140
      %s160 = sphi 0, %s160
      %s162 = sphi 0, %s160
      %s163 = sphi 0, %s162
      %s177 = sphi 0, %s163
      %s181 = sphi 0, %s181
      %s183 = sphi 0, %s181
      %s184 = sphi 0, %s183
      %s198 = sphi 0, %s184
      %s204 = sphi 0, %s206
      %s207 = sphi 0, %s204
      %s208 = sphi 0, %s207
      %s224 = sphi 0, %s208
    $region4: #{tpu_custom_call.1} parent=1 // loop_header_branch
      %23 = sbr.rel (%p21) target = $region8
    $region5: #{tpu_custom_call.1} parent=1 // loop_body
      %s25 = ssub.s32 %s20, 1
      %s26 = ssub.s32 %s20, 2
      %s33 = sadd.s32 1, %s28
      %p34 = scmp.ge.s32.totalorder %s33, 2
      %s35 = scalar_select %p34, 0, %s33
      %s36 = sadd.s32 1, %s27
      %s37 = scalar_select %p34, %s36, %s27
      %p38 = scmp.ge.s32.totalorder %s37, 1
      %s39 = scalar_select %p38, 0, %s37
      %s40 = ssub.s32 %s27, %s39
      %p41 = scmp.eq.s32.totalorder %s40, 0
      %s43 = sadd.s32 %s42, 1
      %s44 = scalar_select %p41, %s42, %s43
      %p47 = pneg %p41
      %p48 = scmp.eq.s32.totalorder %s20, 1
      %p49 = por %p47, %p48
      %p50 = scmp.ne.s32.totalorder %s42, %s45
      %p51 = scmp.eq.s32.totalorder %s20, 0
      %p52 = por %p50, %p51
      %p53 = scmp.ne.s32.totalorder %s42, %s45
      %p54 = scmp.eq.s32.totalorder %s25, 1
      %p55 = por %p53, %p54
      %p56 = scmp.ne.s32.totalorder %s45, %s46
      %p57 = scmp.eq.s32.totalorder %s25, 0
      %p58 = por %p56, %p57
      %p59 = scmp.ne.s32.totalorder %s45, %s46
      %p60 = scmp.eq.s32.totalorder %s26, 1
      %p61 = por %p59, %p60
      %p63 = scmp.ne.s32.totalorder %s46, %s62
      %p64 = scmp.eq.s32.totalorder %s26, 0
      %p65 = por %p63, %p64
      %s67 = sadd.s32 %s66, 1
      %p70 = scmp.eq.s32.totalorder %s20, 1
      %p71 = scmp.ne.s32.totalorder %s66, %s68
      %p72 = scmp.eq.s32.totalorder %s20, 0
      %p73 = por %p71, %p72
      %p74 = scmp.ne.s32.totalorder %s66, %s68
      %p75 = scmp.eq.s32.totalorder %s25, 1
      %p76 = por %p74, %p75
      %p77 = scmp.ne.s32.totalorder %s68, %s69
      %p78 = scmp.eq.s32.totalorder %s25, 0
      %p79 = por %p77, %p78
      %p80 = scmp.ne.s32.totalorder %s68, %s69
      %p81 = scmp.eq.s32.totalorder %s26, 1
      %p82 = por %p80, %p81
      %p84 = scmp.ne.s32.totalorder %s69, %s83
      %p85 = scmp.eq.s32.totalorder %s26, 0
      %p86 = por %p84, %p85
      %s88 = sadd.s32 %s87, 1
      %p91 = scmp.eq.s32.totalorder %s20, 1
      %p92 = scmp.ne.s32.totalorder %s87, %s89
      %p93 = scmp.eq.s32.totalorder %s20, 0
      %p94 = por %p92, %p93
      %p95 = scmp.ne.s32.totalorder %s87, %s89
      %p96 = scmp.eq.s32.totalorder %s25, 1
      %p97 = por %p95, %p96
      %p98 = scmp.ne.s32.totalorder %s89, %s90
      %p99 = scmp.eq.s32.totalorder %s25, 0
      %p100 = por %p98, %p99
      %p101 = scmp.ne.s32.totalorder %s89, %s90
      %p102 = scmp.eq.s32.totalorder %s26, 1
      %p103 = por %p101, %p102
      %p105 = scmp.ne.s32.totalorder %s90, %s104
      %p106 = scmp.eq.s32.totalorder %s26, 0
      %p107 = por %p105, %p106
      %s108 = ssub.s32 %s28, %s35
      %p109 = scmp.eq.s32.totalorder %s108, 0
      %s111 = sadd.s32 %s110, 1
      %s112 = scalar_select %p109, %s110, %s111
      %p115 = pneg %p109
      %p116 = scmp.eq.s32.totalorder %s20, 1
      %p117 = por %p115, %p116
      %p118 = scmp.ne.s32.totalorder %s110, %s113
      %p119 = scmp.eq.s32.totalorder %s20, 0
      %p120 = por %p118, %p119
      %p121 = scmp.ne.s32.totalorder %s110, %s113
      %p122 = scmp.eq.s32.totalorder %s25, 1
      %p123 = por %p121, %p122
      %p124 = scmp.ne.s32.totalorder %s113, %s114
      %p125 = scmp.eq.s32.totalorder %s25, 0
      %p126 = por %p124, %p125
      %p127 = scmp.ne.s32.totalorder %s113, %s114
      %p128 = scmp.eq.s32.totalorder %s26, 1
      %p129 = por %p127, %p128
      %p131 = scmp.ne.s32.totalorder %s114, %s130
      %p132 = scmp.eq.s32.totalorder %s26, 0
      %p133 = por %p131, %p132
      %s134 = ssub.s32 %s28, %s35
      %p135 = scmp.eq.s32.totalorder %s134, 0
      %s137 = sadd.s32 %s136, 1
      %s138 = scalar_select %p135, %s136, %s137
      %p141 = pneg %p135
      %p142 = scmp.eq.s32.totalorder %s20, 1
      %p143 = por %p141, %p142
      %p144 = scmp.ne.s32.totalorder %s136, %s139
      %p145 = scmp.eq.s32.totalorder %s20, 0
      %p146 = por %p144, %p145
      %p147 = scmp.ne.s32.totalorder %s136, %s139
      %p148 = scmp.eq.s32.totalorder %s25, 1
      %p149 = por %p147, %p148
      %p150 = scmp.ne.s32.totalorder %s139, %s140
      %p151 = scmp.eq.s32.totalorder %s25, 0
      %p152 = por %p150, %p151
      %p153 = scmp.ne.s32.totalorder %s139, %s140
      %p154 = scmp.eq.s32.totalorder %s26, 1
      %p155 = por %p153, %p154
      %p157 = scmp.ne.s32.totalorder %s140, %s156
      %p158 = scmp.eq.s32.totalorder %s26, 0
      %p159 = por %p157, %p158
      %s161 = sadd.s32 %s160, 1
      %p164 = scmp.eq.s32.totalorder %s20, 1
      %p165 = scmp.ne.s32.totalorder %s160, %s162
      %p166 = scmp.eq.s32.totalorder %s20, 0
      %p167 = por %p165, %p166
      %p168 = scmp.ne.s32.totalorder %s160, %s162
      %p169 = scmp.eq.s32.totalorder %s25, 1
      %p170 = por %p168, %p169
      %p171 = scmp.ne.s32.totalorder %s162, %s163
      %p172 = scmp.eq.s32.totalorder %s25, 0
      %p173 = por %p171, %p172
      %p174 = scmp.ne.s32.totalorder %s162, %s163
      %p175 = scmp.eq.s32.totalorder %s26, 1
      %p176 = por %p174, %p175
      %p178 = scmp.ne.s32.totalorder %s163, %s177
      %p179 = scmp.eq.s32.totalorder %s26, 0
      %p180 = por %p178, %p179
      %s182 = sadd.s32 %s181, 1
      %p185 = scmp.eq.s32.totalorder %s20, 1
      %p186 = scmp.ne.s32.totalorder %s181, %s183
      %p187 = scmp.eq.s32.totalorder %s20, 0
      %p188 = por %p186, %p187
      %p189 = scmp.ne.s32.totalorder %s181, %s183
      %p190 = scmp.eq.s32.totalorder %s25, 1
      %p191 = por %p189, %p190
      %p192 = scmp.ne.s32.totalorder %s183, %s184
      %p193 = scmp.eq.s32.totalorder %s25, 0
      %p194 = por %p192, %p193
      %p195 = scmp.ne.s32.totalorder %s183, %s184
      %p196 = scmp.eq.s32.totalorder %s26, 1
      %p197 = por %p195, %p196
      %p199 = scmp.ne.s32.totalorder %s184, %s198
      %p200 = scmp.eq.s32.totalorder %s26, 0
      %p201 = por %p199, %p200
      %s202 = ssub.s32 %s27, %s39
      %p203 = scmp.eq.s32.totalorder %s202, 0
      %s205 = sadd.s32 %s204, 1
      %s206 = scalar_select %p203, %s204, %s205
      %p209 = pneg %p203
      %p210 = scmp.eq.s32.totalorder %s20, 1
      %p211 = por %p209, %p210
      %p212 = scmp.ne.s32.totalorder %s204, %s207
      %p213 = scmp.eq.s32.totalorder %s20, 0
      %p214 = por %p212, %p213
      %p215 = scmp.ne.s32.totalorder %s204, %s207
      %p216 = scmp.eq.s32.totalorder %s25, 1
      %p217 = por %p215, %p216
      %p218 = scmp.ne.s32.totalorder %s207, %s208
      %p219 = scmp.eq.s32.totalorder %s25, 0
      %p220 = por %p218, %p219
      %p221 = scmp.ne.s32.totalorder %s207, %s208
      %p222 = scmp.eq.s32.totalorder %s26, 1
      %p223 = por %p221, %p222
      %p225 = scmp.ne.s32.totalorder %s208, %s224
      %p226 = scmp.eq.s32.totalorder %s26, 0
      %p227 = por %p225, %p226
      %p228 = scmp.le.s32.totalorder 1, %s20
      %p229 = scmp.lt.s32.totalorder %s20, 3
      %p230 = pnand %p228, %p229
      %p231 = pneg %p230
      // Predicated region
      $region9: #{tpu_custom_call.1} parent=5 // pred_check
        _
      $region10: #{tpu_custom_call.1} parent=5 // pred_check_branch
        %233 = sbr.rel (%p230) target = $region12
      $region11: #{tpu_custom_call.1} parent=5 // pred_region
        %s234 = ssub.s32 %s20, 1
        // Predicated region
        $region13: #{tpu_custom_call.1} parent=11 // pred_check
          %p235 = pneg %p58
        $region14: #{tpu_custom_call.1} parent=11 // pred_check_branch
          %237 = sbr.rel (%p235) target = $region16
        $region15: #{tpu_custom_call.1} parent=11 // pred_region
          %s238 = smul.u32 2, %s29
          %s240 = ssub.s32 128, 128
          %241 = vsyncadd [#allocation4], %s240
          %s242 = smul.addr %s238, 64
          %s243 = scalar_lea.hbm %s0, %s242
          %s244 = sshll.u32 [#allocation3], 4
          %s245 = int_to_ptr.vmem [resolvable:$true] %s244
          %250 = dma.hbm_to_vmem [thread:$0]  %s243, 128, %s245, [#allocation4], 64, 64, 4
        $region16: #{tpu_custom_call.1} parent=11 // pred_fallthru
          _
        // Predicated region
        $region17: #{tpu_custom_call.1} parent=11 // pred_check
          %p251 = pneg %p79
        $region18: #{tpu_custom_call.1} parent=11 // pred_check_branch
          %253 = sbr.rel (%p251) target = $region20
        $region19: #{tpu_custom_call.1} parent=11 // pred_region
          %s255 = ssub.s32 1024, 1024
          %256 = vsyncadd [#allocation7], %s255
          %s257 = sshll.u32 [#allocation6], 4
          %s258 = int_to_ptr.vmem [resolvable:$true] %s257
          %263 = dma.hbm_to_vmem [thread:$0]  %s1, 1024, %s258, [#allocation7], 64, 64, 4
        $region20: #{tpu_custom_call.1} parent=11 // pred_fallthru
          _
        // Predicated region
        $region21: #{tpu_custom_call.1} parent=11 // pred_check
          %p264 = pneg %p100
        $region22: #{tpu_custom_call.1} parent=11 // pred_check_branch
          %266 = sbr.rel (%p264) target = $region24
        $region23: #{tpu_custom_call.1} parent=11 // pred_region
          %s268 = ssub.s32 16, 16
          %269 = vsyncadd [#allocation7], %s268
          %s271 = sshll.u32 [#allocation8], 4
          %s272 = int_to_ptr.vmem [resolvable:$true] %s271
          %274 = dma.hbm_to_vmem [thread:$0]  %s2, 16, %s272, [#allocation7]
        $region24: #{tpu_custom_call.1} parent=11 // pred_fallthru
          _
        // Predicated region
        $region25: #{tpu_custom_call.1} parent=11 // pred_check
          %p275 = pneg %p173
        $region26: #{tpu_custom_call.1} parent=11 // pred_check_branch
          %277 = sbr.rel (%p275) target = $region28
        $region27: #{tpu_custom_call.1} parent=11 // pred_region
          %s279 = ssub.s32 1024, 1024
          %280 = vsyncadd [#allocation13], %s279
          %s281 = sshll.u32 [#allocation12], 4
          %s282 = int_to_ptr.vmem [resolvable:$true] %s281
          %287 = dma.hbm_to_vmem [thread:$0]  %s5, 1024, %s282, [#allocation13], 64, 64, 4
        $region28: #{tpu_custom_call.1} parent=11 // pred_fallthru
          _
        // Predicated region
        $region29: #{tpu_custom_call.1} parent=11 // pred_check
          %p288 = pneg %p194
        $region30: #{tpu_custom_call.1} parent=11 // pred_check_branch
          %290 = sbr.rel (%p288) target = $region32
        $region31: #{tpu_custom_call.1} parent=11 // pred_region
          %s292 = ssub.s32 16, 16
          %293 = vsyncadd [#allocation13], %s292
          %s295 = sshll.u32 [#allocation14], 4
          %s296 = int_to_ptr.vmem [resolvable:$true] %s295
          %298 = dma.hbm_to_vmem [thread:$0]  %s6, 16, %s296, [#allocation13]
        $region32: #{tpu_custom_call.1} parent=11 // pred_fallthru
          _
      $region12: #{tpu_custom_call.1} parent=5 // pred_fallthru
        _
      %p299 = scmp.lt.s32.totalorder %s20, 2
      // Predicated region
      $region33: #{tpu_custom_call.1} parent=5 // pred_check
        %p300 = pneg %p299
      $region34: #{tpu_custom_call.1} parent=5 // pred_check_branch
        %302 = sbr.rel (%p300) target = $region36
      $region35: #{tpu_custom_call.1} parent=5 // pred_region
        // Predicated region
        $region37: #{tpu_custom_call.1} parent=35 // pred_check
          %p303 = pneg %p120
        $region38: #{tpu_custom_call.1} parent=35 // pred_check_branch
          %305 = sbr.rel (%p303) target = $region40
        $region39: #{tpu_custom_call.1} parent=35 // pred_region
          %s306 = sand.u32 %s20, 1
          %s307 = scalar_lea.sflag [#allocation10], %s306
          %s308 = sand.u32 %s110, 1
          %s309 = smul.addr %s308, 192
          %s310 = scalar_lea.vmem [#allocation9], %s309
          %s312 = ssub.s32 3072, 3072
          %313 = vsyncadd %s307, %s312
          %s314 = smul.addr %s28, 48
          %s315 = smul.addr %s314, 64
          %s316 = scalar_lea.hbm %s3, %s315
          %s317 = sshll.u32 %s310, 4
          %s318 = int_to_ptr.vmem [resolvable:$true] %s317
          %323 = dma.hbm_to_vmem [thread:$0]  %s316, 3072, %s318, %s307, 64, 64, 4
        $region40: #{tpu_custom_call.1} parent=35 // pred_fallthru
          _
        // Predicated region
        $region41: #{tpu_custom_call.1} parent=35 // pred_check
          %p324 = pneg %p146
        $region42: #{tpu_custom_call.1} parent=35 // pred_check_branch
          %326 = sbr.rel (%p324) target = $region44
        $region43: #{tpu_custom_call.1} parent=35 // pred_region
          %s327 = sand.u32 %s20, 1
          %s328 = scalar_lea.sflag [#allocation10], %s327
          %s329 = sand.u32 %s136, 1
          %s330 = smul.addr %s329, 3
          %s331 = scalar_lea.vmem [#allocation11], %s330
          %s333 = ssub.s32 48, 48
          %334 = vsyncadd %s328, %s333
          %s335 = smul.addr %s28, 3
          %s336 = smul.addr %s335, 16
          %s337 = scalar_lea.hbm %s4, %s336
          %s338 = sshll.u32 %s331, 4
          %s339 = int_to_ptr.vmem [resolvable:$true] %s338
          %344 = dma.hbm_to_vmem [thread:$0]  %s337, 48, %s339, %s328, 16, 16, 1
        $region44: #{tpu_custom_call.1} parent=35 // pred_fallthru
          _
      $region36: #{tpu_custom_call.1} parent=5 // pred_fallthru
        _
      %p345 = scmp.le.s32.totalorder 1, %s20
      %p346 = scmp.lt.s32.totalorder %s20, 3
      %p347 = pnand %p345, %p346
      %p348 = pneg %p347
      // Predicated region
      $region45: #{tpu_custom_call.1} parent=5 // pred_check
        _
      $region46: #{tpu_custom_call.1} parent=5 // pred_check_branch
        %350 = sbr.rel (%p347) target = $region48
      $region47: #{tpu_custom_call.1} parent=5 // pred_region
        %s351 = ssub.s32 %s20, 1
        // Predicated region
        $region49: #{tpu_custom_call.1} parent=47 // pred_check
          %p352 = pneg %p58
        $region50: #{tpu_custom_call.1} parent=47 // pred_check_branch
          %354 = sbr.rel (%p352) target = $region52
        $region51: #{tpu_custom_call.1} parent=47 // pred_region
          %355 = dma.done [#allocation4], 128
        $region52: #{tpu_custom_call.1} parent=47 // pred_fallthru
          _
        // Predicated region
        $region53: #{tpu_custom_call.1} parent=47 // pred_check
          %p356 = pneg %p79
        $region54: #{tpu_custom_call.1} parent=47 // pred_check_branch
          %358 = sbr.rel (%p356) target = $region56
        $region55: #{tpu_custom_call.1} parent=47 // pred_region
          %359 = dma.done [#allocation7], 1024
        $region56: #{tpu_custom_call.1} parent=47 // pred_fallthru
          _
        // Predicated region
        $region57: #{tpu_custom_call.1} parent=47 // pred_check
          %p360 = pneg %p100
        $region58: #{tpu_custom_call.1} parent=47 // pred_check_branch
          %362 = sbr.rel (%p360) target = $region60
        $region59: #{tpu_custom_call.1} parent=47 // pred_region
          %363 = dma.done [#allocation7], 16
        $region60: #{tpu_custom_call.1} parent=47 // pred_fallthru
          _
        %s364 = sand.u32 %s25, 1
        %s365 = scalar_lea.sflag [#allocation10], %s364
        %s366 = sand.u32 %s113, 1
        %s367 = smul.addr %s366, 192
        %s368 = scalar_lea.vmem [#allocation9], %s367
        // Predicated region
        $region61: #{tpu_custom_call.1} parent=47 // pred_check
          %p369 = pneg %p126
        $region62: #{tpu_custom_call.1} parent=47 // pred_check_branch
          %371 = sbr.rel (%p369) target = $region64
        $region63: #{tpu_custom_call.1} parent=47 // pred_region
          %372 = dma.done %s365, 3072
        $region64: #{tpu_custom_call.1} parent=47 // pred_fallthru
          _
        %s373 = sand.u32 %s25, 1
        %s374 = scalar_lea.sflag [#allocation10], %s373
        %s375 = sand.u32 %s139, 1
        %s376 = smul.addr %s375, 3
        %s377 = scalar_lea.vmem [#allocation11], %s376
        // Predicated region
        $region65: #{tpu_custom_call.1} parent=47 // pred_check
          %p378 = pneg %p152
        $region66: #{tpu_custom_call.1} parent=47 // pred_check_branch
          %380 = sbr.rel (%p378) target = $region68
        $region67: #{tpu_custom_call.1} parent=47 // pred_region
          %381 = dma.done %s374, 48
        $region68: #{tpu_custom_call.1} parent=47 // pred_fallthru
          _
        // Predicated region
        $region69: #{tpu_custom_call.1} parent=47 // pred_check
          %p382 = pneg %p173
        $region70: #{tpu_custom_call.1} parent=47 // pred_check_branch
          %384 = sbr.rel (%p382) target = $region72
        $region71: #{tpu_custom_call.1} parent=47 // pred_region
          %385 = dma.done [#allocation13], 1024
        $region72: #{tpu_custom_call.1} parent=47 // pred_fallthru
          _
        // Predicated region
        $region73: #{tpu_custom_call.1} parent=47 // pred_check
          %p386 = pneg %p194
        $region74: #{tpu_custom_call.1} parent=47 // pred_check_branch
          %388 = sbr.rel (%p386) target = $region76
        $region75: #{tpu_custom_call.1} parent=47 // pred_region
          %389 = dma.done [#allocation13], 16
        $region76: #{tpu_custom_call.1} parent=47 // pred_fallthru
          _
        %p390 = pneg %p58
        %p391 = pneg %p55
        %p392 = pneg %p79
        %p393 = pneg %p76
        %p394 = pneg %p100
        %p395 = pneg %p97
        %s396 = sand.u32 %s25, 1
        %s397 = scalar_lea.sflag [#allocation10], %s396
        %s398 = sand.u32 %s113, 1
        %s399 = smul.addr %s398, 192
        %s400 = scalar_lea.vmem [#allocation9], %s399
        %p401 = pneg %p126
        %p402 = pneg %p123
        %s403 = sand.u32 %s25, 1
        %s404 = scalar_lea.sflag [#allocation10], %s403
        %s405 = sand.u32 %s139, 1
        %s406 = smul.addr %s405, 3
        %s407 = scalar_lea.vmem [#allocation11], %s406
        %p408 = pneg %p152
        %p409 = pneg %p149
        %p410 = pneg %p173
        %p411 = pneg %p170
        %p412 = pneg %p194
        %p413 = pneg %p191
        %p414 = pneg %p220
        %p415 = pneg %p217
        %s416 = smul.u32 2, %s29
        %s417 = smul.u32 2, %s29
        %p419 = scmp.eq.s32.totalorder %s30, 0
        // Predicated region
        $region77: #{tpu_custom_call.1} parent=47 // pred_check
          %p420 = pneg %p419
        $region78: #{tpu_custom_call.1} parent=47 // pred_check_branch
          %422 = sbr.rel (%p420) target = $region80
        $region79: #{tpu_custom_call.1} parent=47 // pred_region
          %v423 = vld [vmem:[#allocation3] sm:$0xf]
          %v424 = vld [vmem:[#allocation3 + $0x4] sm:$0xf]
          %v425 = vld [vmem:[#allocation6] sm:$0xf]
          %v426 = vld [vmem:[#allocation6 + $0x4] sm:$0xf]
          %v427 = vld [vmem:[#allocation6 + $0x8] sm:$0xf]
          %v428 = vld [vmem:[#allocation6 + $0xc] sm:$0xf]
          %v429 = vld [vmem:[#allocation6 + $0x10] sm:$0xf]
          %v430 = vld [vmem:[#allocation6 + $0x14] sm:$0xf]
          %v431 = vld [vmem:[#allocation6 + $0x18] sm:$0xf]
          %v432 = vld [vmem:[#allocation6 + $0x1c] sm:$0xf]
          %v433 = vld [vmem:[#allocation6 + $0x20] sm:$0xf]
          %v434 = vld [vmem:[#allocation6 + $0x24] sm:$0xf]
          %v435 = vld [vmem:[#allocation6 + $0x28] sm:$0xf]
          %v436 = vld [vmem:[#allocation6 + $0x2c] sm:$0xf]
          %v437 = vld [vmem:[#allocation6 + $0x30] sm:$0xf]
          %v438 = vld [vmem:[#allocation6 + $0x34] sm:$0xf]
          %v439 = vld [vmem:[#allocation6 + $0x38] sm:$0xf]
          %v440 = vld [vmem:[#allocation6 + $0x3c] sm:$0xf]
          %v441 = vld [vmem:[#allocation8] sm:$0x1]
          %v443 = vlaneseq
          %v444 = vshrl.u32 %v443, 7
          %v445 = vsub.s32 0, %v444
          %v446 = vrot.slane %v441, %v445
          %v450 = vunpack.c.l.b16 %v423
          %v451 = vunpack.c.l.b16 %v424
          %v452 = vpack.c.b16 %v451, %v450
          %v470 = vunpack.c.l.b16 %v425
          %v471 = vunpack.c.l.b16 %v426
          %v472 = vunpack.c.l.b16 %v427
          %v473 = vunpack.c.l.b16 %v428
          %v474 = vunpack.c.l.b16 %v429
          %v475 = vunpack.c.l.b16 %v430
          %v476 = vunpack.c.l.b16 %v431
          %v477 = vunpack.c.l.b16 %v432
          %v478 = vunpack.c.l.b16 %v433
          %v479 = vunpack.c.l.b16 %v434
          %v480 = vunpack.c.l.b16 %v435
          %v481 = vunpack.c.l.b16 %v436
          %v482 = vunpack.c.l.b16 %v437
          %v483 = vunpack.c.l.b16 %v438
          %v484 = vunpack.c.l.b16 %v439
          %v485 = vunpack.c.l.b16 %v440
          %v486 = vpack.c.b16 %v471, %v470
          %v487 = vpack.c.b16 %v473, %v472
          %v488 = vpack.c.b16 %v475, %v474
          %v489 = vpack.c.b16 %v477, %v476
          %v490 = vpack.c.b16 %v479, %v478
          %v491 = vpack.c.b16 %v481, %v480
          %v492 = vpack.c.b16 %v483, %v482
          %v493 = vpack.c.b16 %v485, %v484
          %502 = vmatprep.subr.bf16.mxu0 0
          %503 = vmatpush1.bf16.msra.mxu0 %v486
          %504 = vmatprep.subr.bf16.mxu0 0
          %505 = vmatpush1.bf16.msra.mxu0 %v487
          %506 = vmatprep.subr.bf16.mxu0 0
          %507 = vmatpush1.bf16.msra.mxu0 %v488
          %508 = vmatprep.subr.bf16.mxu0 0
          %509 = vmatpush1.bf16.msra.mxu0 %v489
          %510 = vmatprep.subr.bf16.mxu0 0
          %511 = vmatpush1.bf16.msra.mxu0 %v490
          %512 = vmatprep.subr.bf16.mxu0 0
          %513 = vmatpush1.bf16.msra.mxu0 %v491
          %514 = vmatprep.subr.bf16.mxu0 0
          %515 = vmatpush1.bf16.msra.mxu0 %v492
          %516 = vmatprep.subr.bf16.mxu0 0
          %517 = vmatpush1.bf16.msra.mxu0 %v493
          %518 = vmatprep.subr.bf16.mxu0 0
          %519 = vmatpush1.bf16.msra.mxu0 0
          %520 = vmatprep.subr.bf16.mxu0 0
          %521 = vmatpush1.bf16.msra.mxu0 0
          %522 = vmatprep.subr.bf16.mxu0 0
          %523 = vmatpush1.bf16.msra.mxu0 0
          %524 = vmatprep.subr.bf16.mxu0 0
          %525 = vmatpush1.bf16.msra.mxu0 0
          %526 = vmatprep.subr.bf16.mxu0 0
          %527 = vmatpush1.bf16.msra.mxu0 0
          %528 = vmatprep.subr.bf16.mxu0 0
          %529 = vmatpush1.bf16.msra.mxu0 0
          %530 = vmatprep.subr.bf16.mxu0 0
          %531 = vmatpush1.bf16.msra.mxu0 0
          %532 = vmatprep.subr.bf16.mxu0 0
          %533 = vmatpush1.bf16.msra.mxu0 0
          %534 = vmatprep.mubr.bf16.mxu0 0
          %535 = vmatmul.mubr.bf16.gmra.mrb[0].mxu0 %v452
          %v536 = vpop.f32.mrb[0].mxu0
          %v537 = vadd.f32 %v446, %v536
          %v538 = vpop.f32.mrb[0].mxu0
          %v539 = vpop.f32.mrb[0].mxu0
          %v540 = vadd.f32 %v446, %v539
          %v541 = vpop.f32.mrb[0].mxu0
          %542 = vdwg.mxu0
          %v543 = vmax.f32 %v537, 0.0
          %v544 = vmax.f32 %v540, 0.0
          %545 = vst [vmem:[#allocation2] sm:$0xff] %v543
          %546 = vst [vmem:[#allocation2 + $0x8] sm:$0xff] %v544
        $region80: #{tpu_custom_call.1} parent=47 // pred_fallthru
          _
        %v547 = vld [vmem:[#allocation2] sm:$0xff]
        %v548 = vld [vmem:[#allocation2 + $0x8] sm:$0xff]
        %v549 = vpack.c.bf16 %v548, %v547
        %v550 = vld [vmem:[%s368] sm:$0xf]
        %v551 = vld [vmem:[%s368 + $0x4] sm:$0xf]
        %v552 = vld [vmem:[%s368 + $0x8] sm:$0xf]
        %v553 = vld [vmem:[%s368 + $0xc] sm:$0xf]
        %v554 = vld [vmem:[%s368 + $0x10] sm:$0xf]
        %v555 = vld [vmem:[%s368 + $0x14] sm:$0xf]
        %v556 = vld [vmem:[%s368 + $0x18] sm:$0xf]
        %v557 = vld [vmem:[%s368 + $0x1c] sm:$0xf]
        %v558 = vld [vmem:[%s368 + $0x20] sm:$0xf]
        %v559 = vld [vmem:[%s368 + $0x24] sm:$0xf]
        %v560 = vld [vmem:[%s368 + $0x28] sm:$0xf]
        %v561 = vld [vmem:[%s368 + $0x2c] sm:$0xf]
        %v562 = vld [vmem:[%s368 + $0x30] sm:$0xf]
        %v563 = vld [vmem:[%s368 + $0x34] sm:$0xf]
        %v564 = vld [vmem:[%s368 + $0x38] sm:$0xf]
        %v565 = vld [vmem:[%s368 + $0x3c] sm:$0xf]
        %v566 = vld [vmem:[%s377] sm:$0x1]
        %v568 = vlaneseq
        %v569 = vshrl.u32 %v568, 7
        %v570 = vsub.s32 0, %v569
        %v571 = vrot.slane %v566, %v570
        %v589 = vunpack.c.l.b16 %v550
        %v590 = vunpack.c.l.b16 %v551
        %v591 = vunpack.c.l.b16 %v552
        %v592 = vunpack.c.l.b16 %v553
        %v593 = vunpack.c.l.b16 %v554
        %v594 = vunpack.c.l.b16 %v555
        %v595 = vunpack.c.l.b16 %v556
        %v596 = vunpack.c.l.b16 %v557
        %v597 = vunpack.c.l.b16 %v558
        %v598 = vunpack.c.l.b16 %v559
        %v599 = vunpack.c.l.b16 %v560
        %v600 = vunpack.c.l.b16 %v561
        %v601 = vunpack.c.l.b16 %v562
        %v602 = vunpack.c.l.b16 %v563
        %v603 = vunpack.c.l.b16 %v564
        %v604 = vunpack.c.l.b16 %v565
        %v605 = vpack.c.b16 %v590, %v589
        %v606 = vpack.c.b16 %v592, %v591
        %v607 = vpack.c.b16 %v594, %v593
        %v608 = vpack.c.b16 %v596, %v595
        %v609 = vpack.c.b16 %v598, %v597
        %v610 = vpack.c.b16 %v600, %v599
        %v611 = vpack.c.b16 %v602, %v601
        %v612 = vpack.c.b16 %v604, %v603
        %621 = vmatprep.subr.bf16.mxu0 0
        %622 = vmatpush1.bf16.msra.mxu0 %v605
        %623 = vmatprep.subr.bf16.mxu0 0
        %624 = vmatpush1.bf16.msra.mxu0 %v606
        %625 = vmatprep.subr.bf16.mxu0 0
        %626 = vmatpush1.bf16.msra.mxu0 %v607
        %627 = vmatprep.subr.bf16.mxu0 0
        %628 = vmatpush1.bf16.msra.mxu0 %v608
        %629 = vmatprep.subr.bf16.mxu0 0
        %630 = vmatpush1.bf16.msra.mxu0 %v609
        %631 = vmatprep.subr.bf16.mxu0 0
        %632 = vmatpush1.bf16.msra.mxu0 %v610
        %633 = vmatprep.subr.bf16.mxu0 0
        %634 = vmatpush1.bf16.msra.mxu0 %v611
        %635 = vmatprep.subr.bf16.mxu0 0
        %636 = vmatpush1.bf16.msra.mxu0 %v612
        %637 = vmatprep.subr.bf16.mxu0 0
        %638 = vmatpush1.bf16.msra.mxu0 0
        %639 = vmatprep.subr.bf16.mxu0 0
        %640 = vmatpush1.bf16.msra.mxu0 0
        %641 = vmatprep.subr.bf16.mxu0 0
        %642 = vmatpush1.bf16.msra.mxu0 0
        %643 = vmatprep.subr.bf16.mxu0 0
        %644 = vmatpush1.bf16.msra.mxu0 0
        %645 = vmatprep.subr.bf16.mxu0 0
        %646 = vmatpush1.bf16.msra.mxu0 0
        %647 = vmatprep.subr.bf16.mxu0 0
        %648 = vmatpush1.bf16.msra.mxu0 0
        %649 = vmatprep.subr.bf16.mxu0 0
        %650 = vmatpush1.bf16.msra.mxu0 0
        %651 = vmatprep.subr.bf16.mxu0 0
        %652 = vmatpush1.bf16.msra.mxu0 0
        %653 = vmatprep.mubr.bf16.mxu0 0
        %654 = vmatmul.mubr.bf16.gmra.mrb[0].mxu0 %v549
        %v655 = vpop.f32.mrb[0].mxu0
        %v656 = vadd.f32 %v571, %v655
        %v657 = vpop.f32.mrb[0].mxu0
        %v658 = vpop.f32.mrb[0].mxu0
        %v659 = vadd.f32 %v571, %v658
        %v660 = vpop.f32.mrb[0].mxu0
        %661 = vdwg.mxu0
        %v662 = vmax.f32 %v656, 0.0
        %v663 = vmax.f32 %v659, 0.0
        %v664 = vpack.c.bf16 %v663, %v662
        %s665 = scalar_lea.vmem %s368, 64 [#allocation9]
        %v666 = vld [vmem:[%s665] sm:$0xf]
        %v667 = vld [vmem:[%s665 + $0x4] sm:$0xf]
        %v668 = vld [vmem:[%s665 + $0x8] sm:$0xf]
        %v669 = vld [vmem:[%s665 + $0xc] sm:$0xf]
        %v670 = vld [vmem:[%s665 + $0x10] sm:$0xf]
        %v671 = vld [vmem:[%s665 + $0x14] sm:$0xf]
        %v672 = vld [vmem:[%s665 + $0x18] sm:$0xf]
        %v673 = vld [vmem:[%s665 + $0x1c] sm:$0xf]
        %v674 = vld [vmem:[%s665 + $0x20] sm:$0xf]
        %v675 = vld [vmem:[%s665 + $0x24] sm:$0xf]
        %v676 = vld [vmem:[%s665 + $0x28] sm:$0xf]
        %v677 = vld [vmem:[%s665 + $0x2c] sm:$0xf]
        %v678 = vld [vmem:[%s665 + $0x30] sm:$0xf]
        %v679 = vld [vmem:[%s665 + $0x34] sm:$0xf]
        %v680 = vld [vmem:[%s665 + $0x38] sm:$0xf]
        %v681 = vld [vmem:[%s665 + $0x3c] sm:$0xf]
        %s682 = scalar_lea.vmem %s377, 1 [#allocation11]
        %v683 = vld [vmem:[%s682] sm:$0x1]
        %v685 = vlaneseq
        %v686 = vshrl.u32 %v685, 7
        %v687 = vsub.s32 0, %v686
        %v688 = vrot.slane %v683, %v687
        %v706 = vunpack.c.l.b16 %v666
        %v707 = vunpack.c.l.b16 %v667
        %v708 = vunpack.c.l.b16 %v668
        %v709 = vunpack.c.l.b16 %v669
        %v710 = vunpack.c.l.b16 %v670
        %v711 = vunpack.c.l.b16 %v671
        %v712 = vunpack.c.l.b16 %v672
        %v713 = vunpack.c.l.b16 %v673
        %v714 = vunpack.c.l.b16 %v674
        %v715 = vunpack.c.l.b16 %v675
        %v716 = vunpack.c.l.b16 %v676
        %v717 = vunpack.c.l.b16 %v677
        %v718 = vunpack.c.l.b16 %v678
        %v719 = vunpack.c.l.b16 %v679
        %v720 = vunpack.c.l.b16 %v680
        %v721 = vunpack.c.l.b16 %v681
        %v722 = vpack.c.b16 %v707, %v706
        %v723 = vpack.c.b16 %v709, %v708
        %v724 = vpack.c.b16 %v711, %v710
        %v725 = vpack.c.b16 %v713, %v712
        %v726 = vpack.c.b16 %v715, %v714
        %v727 = vpack.c.b16 %v717, %v716
        %v728 = vpack.c.b16 %v719, %v718
        %v729 = vpack.c.b16 %v721, %v720
        %738 = vmatprep.subr.bf16.mxu0 0
        %739 = vmatpush1.bf16.msra.mxu0 %v722
        %740 = vmatprep.subr.bf16.mxu0 0
        %741 = vmatpush1.bf16.msra.mxu0 %v723
        %742 = vmatprep.subr.bf16.mxu0 0
        %743 = vmatpush1.bf16.msra.mxu0 %v724
        %744 = vmatprep.subr.bf16.mxu0 0
        %745 = vmatpush1.bf16.msra.mxu0 %v725
        %746 = vmatprep.subr.bf16.mxu0 0
        %747 = vmatpush1.bf16.msra.mxu0 %v726
        %748 = vmatprep.subr.bf16.mxu0 0
        %749 = vmatpush1.bf16.msra.mxu0 %v727
        %750 = vmatprep.subr.bf16.mxu0 0
        %751 = vmatpush1.bf16.msra.mxu0 %v728
        %752 = vmatprep.subr.bf16.mxu0 0
        %753 = vmatpush1.bf16.msra.mxu0 %v729
        %754 = vmatprep.subr.bf16.mxu0 0
        %755 = vmatpush1.bf16.msra.mxu0 0
        %756 = vmatprep.subr.bf16.mxu0 0
        %757 = vmatpush1.bf16.msra.mxu0 0
        %758 = vmatprep.subr.bf16.mxu0 0
        %759 = vmatpush1.bf16.msra.mxu0 0
        %760 = vmatprep.subr.bf16.mxu0 0
        %761 = vmatpush1.bf16.msra.mxu0 0
        %762 = vmatprep.subr.bf16.mxu0 0
        %763 = vmatpush1.bf16.msra.mxu0 0
        %764 = vmatprep.subr.bf16.mxu0 0
        %765 = vmatpush1.bf16.msra.mxu0 0
        %766 = vmatprep.subr.bf16.mxu0 0
        %767 = vmatpush1.bf16.msra.mxu0 0
        %768 = vmatprep.subr.bf16.mxu0 0
        %769 = vmatpush1.bf16.msra.mxu0 0
        %770 = vmatprep.mubr.bf16.mxu0 0
        %771 = vmatmul.mubr.bf16.gmra.mrb[0].mxu0 %v664
        %v772 = vpop.f32.mrb[0].mxu0
        %v773 = vadd.f32 %v688, %v772
        %v774 = vpop.f32.mrb[0].mxu0
        %v775 = vpop.f32.mrb[0].mxu0
        %v776 = vadd.f32 %v688, %v775
        %v777 = vpop.f32.mrb[0].mxu0
        %778 = vdwg.mxu0
        %v779 = vmax.f32 %v773, 0.0
        %v780 = vmax.f32 %v776, 0.0
        %v781 = vpack.c.bf16 %v780, %v779
        %s782 = scalar_lea.vmem %s368, 128 [#allocation9]
        %v783 = vld [vmem:[%s782] sm:$0xf]
        %v784 = vld [vmem:[%s782 + $0x4] sm:$0xf]
        %v785 = vld [vmem:[%s782 + $0x8] sm:$0xf]
        %v786 = vld [vmem:[%s782 + $0xc] sm:$0xf]
        %v787 = vld [vmem:[%s782 + $0x10] sm:$0xf]
        %v788 = vld [vmem:[%s782 + $0x14] sm:$0xf]
        %v789 = vld [vmem:[%s782 + $0x18] sm:$0xf]
        %v790 = vld [vmem:[%s782 + $0x1c] sm:$0xf]
        %v791 = vld [vmem:[%s782 + $0x20] sm:$0xf]
        %v792 = vld [vmem:[%s782 + $0x24] sm:$0xf]
        %v793 = vld [vmem:[%s782 + $0x28] sm:$0xf]
        %v794 = vld [vmem:[%s782 + $0x2c] sm:$0xf]
        %v795 = vld [vmem:[%s782 + $0x30] sm:$0xf]
        %v796 = vld [vmem:[%s782 + $0x34] sm:$0xf]
        %v797 = vld [vmem:[%s782 + $0x38] sm:$0xf]
        %v798 = vld [vmem:[%s782 + $0x3c] sm:$0xf]
        %s799 = scalar_lea.vmem %s377, 2 [#allocation11]
        %v800 = vld [vmem:[%s799] sm:$0x1]
        %v802 = vlaneseq
        %v803 = vshrl.u32 %v802, 7
        %v804 = vsub.s32 0, %v803
        %v805 = vrot.slane %v800, %v804
        %v823 = vunpack.c.l.b16 %v783
        %v824 = vunpack.c.l.b16 %v784
        %v825 = vunpack.c.l.b16 %v785
        %v826 = vunpack.c.l.b16 %v786
        %v827 = vunpack.c.l.b16 %v787
        %v828 = vunpack.c.l.b16 %v788
        %v829 = vunpack.c.l.b16 %v789
        %v830 = vunpack.c.l.b16 %v790
        %v831 = vunpack.c.l.b16 %v791
        %v832 = vunpack.c.l.b16 %v792
        %v833 = vunpack.c.l.b16 %v793
        %v834 = vunpack.c.l.b16 %v794
        %v835 = vunpack.c.l.b16 %v795
        %v836 = vunpack.c.l.b16 %v796
        %v837 = vunpack.c.l.b16 %v797
        %v838 = vunpack.c.l.b16 %v798
        %v839 = vpack.c.b16 %v824, %v823
        %v840 = vpack.c.b16 %v826, %v825
        %v841 = vpack.c.b16 %v828, %v827
        %v842 = vpack.c.b16 %v830, %v829
        %v843 = vpack.c.b16 %v832, %v831
        %v844 = vpack.c.b16 %v834, %v833
        %v845 = vpack.c.b16 %v836, %v835
        %v846 = vpack.c.b16 %v838, %v837
        %855 = vmatprep.subr.bf16.mxu0 0
        %856 = vmatpush1.bf16.msra.mxu0 %v839
        %857 = vmatprep.subr.bf16.mxu0 0
        %858 = vmatpush1.bf16.msra.mxu0 %v840
        %859 = vmatprep.subr.bf16.mxu0 0
        %860 = vmatpush1.bf16.msra.mxu0 %v841
        %861 = vmatprep.subr.bf16.mxu0 0
        %862 = vmatpush1.bf16.msra.mxu0 %v842
        %863 = vmatprep.subr.bf16.mxu0 0
        %864 = vmatpush1.bf16.msra.mxu0 %v843
        %865 = vmatprep.subr.bf16.mxu0 0
        %866 = vmatpush1.bf16.msra.mxu0 %v844
        %867 = vmatprep.subr.bf16.mxu0 0
        %868 = vmatpush1.bf16.msra.mxu0 %v845
        %869 = vmatprep.subr.bf16.mxu0 0
        %870 = vmatpush1.bf16.msra.mxu0 %v846
        %871 = vmatprep.subr.bf16.mxu0 0
        %872 = vmatpush1.bf16.msra.mxu0 0
        %873 = vmatprep.subr.bf16.mxu0 0
        %874 = vmatpush1.bf16.msra.mxu0 0
        %875 = vmatprep.subr.bf16.mxu0 0
        %876 = vmatpush1.bf16.msra.mxu0 0
        %877 = vmatprep.subr.bf16.mxu0 0
        %878 = vmatpush1.bf16.msra.mxu0 0
        %879 = vmatprep.subr.bf16.mxu0 0
        %880 = vmatpush1.bf16.msra.mxu0 0
        %881 = vmatprep.subr.bf16.mxu0 0
        %882 = vmatpush1.bf16.msra.mxu0 0
        %883 = vmatprep.subr.bf16.mxu0 0
        %884 = vmatpush1.bf16.msra.mxu0 0
        %885 = vmatprep.subr.bf16.mxu0 0
        %886 = vmatpush1.bf16.msra.mxu0 0
        %887 = vmatprep.mubr.bf16.mxu0 0
        %888 = vmatmul.mubr.bf16.gmra.mrb[0].mxu0 %v781
        %v889 = vpop.f32.mrb[0].mxu0
        %v890 = vadd.f32 %v805, %v889
        %v891 = vpop.f32.mrb[0].mxu0
        %v892 = vpop.f32.mrb[0].mxu0
        %v893 = vadd.f32 %v805, %v892
        %v894 = vpop.f32.mrb[0].mxu0
        %895 = vdwg.mxu0
        %v896 = vadd.f32 %v890, %v547
        %v897 = vadd.f32 %v893, %v548
        %v898 = vmax.f32 %v896, 0.0
        %v899 = vmax.f32 %v897, 0.0
        %900 = vst [vmem:[#allocation2] sm:$0xff] %v898
        %901 = vst [vmem:[#allocation2 + $0x8] sm:$0xff] %v899
        %p902 = scmp.eq.s32.totalorder %s30, 1
        // Predicated region
        $region81: #{tpu_custom_call.1} parent=47 // pred_check
          %p903 = pneg %p902
        $region82: #{tpu_custom_call.1} parent=47 // pred_check_branch
          %905 = sbr.rel (%p903) target = $region84
        $region83: #{tpu_custom_call.1} parent=47 // pred_region
          %v906 = vpack.c.bf16 %v899, %v898
          %v907 = vld [vmem:[#allocation12] sm:$0xf]
          %v908 = vld [vmem:[#allocation12 + $0x4] sm:$0xf]
          %v909 = vld [vmem:[#allocation12 + $0x8] sm:$0xf]
          %v910 = vld [vmem:[#allocation12 + $0xc] sm:$0xf]
          %v911 = vld [vmem:[#allocation12 + $0x10] sm:$0xf]
          %v912 = vld [vmem:[#allocation12 + $0x14] sm:$0xf]
          %v913 = vld [vmem:[#allocation12 + $0x18] sm:$0xf]
          %v914 = vld [vmem:[#allocation12 + $0x1c] sm:$0xf]
          %v915 = vld [vmem:[#allocation12 + $0x20] sm:$0xf]
          %v916 = vld [vmem:[#allocation12 + $0x24] sm:$0xf]
          %v917 = vld [vmem:[#allocation12 + $0x28] sm:$0xf]
          %v918 = vld [vmem:[#allocation12 + $0x2c] sm:$0xf]
          %v919 = vld [vmem:[#allocation12 + $0x30] sm:$0xf]
          %v920 = vld [vmem:[#allocation12 + $0x34] sm:$0xf]
          %v921 = vld [vmem:[#allocation12 + $0x38] sm:$0xf]
          %v922 = vld [vmem:[#allocation12 + $0x3c] sm:$0xf]
          %v923 = vld [vmem:[#allocation14] sm:$0x1]
          %v925 = vlaneseq
          %v926 = vshrl.u32 %v925, 7
          %v927 = vsub.s32 0, %v926
          %v928 = vrot.slane %v923, %v927
          %v946 = vunpack.c.l.b16 %v907
          %v947 = vunpack.c.l.b16 %v908
          %v948 = vunpack.c.l.b16 %v909
          %v949 = vunpack.c.l.b16 %v910
          %v950 = vunpack.c.l.b16 %v911
          %v951 = vunpack.c.l.b16 %v912
          %v952 = vunpack.c.l.b16 %v913
          %v953 = vunpack.c.l.b16 %v914
          %v954 = vunpack.c.l.b16 %v915
          %v955 = vunpack.c.l.b16 %v916
          %v956 = vunpack.c.l.b16 %v917
          %v957 = vunpack.c.l.b16 %v918
          %v958 = vunpack.c.l.b16 %v919
          %v959 = vunpack.c.l.b16 %v920
          %v960 = vunpack.c.l.b16 %v921
          %v961 = vunpack.c.l.b16 %v922
          %v962 = vpack.c.b16 %v947, %v946
          %v963 = vpack.c.b16 %v949, %v948
          %v964 = vpack.c.b16 %v951, %v950
          %v965 = vpack.c.b16 %v953, %v952
          %v966 = vpack.c.b16 %v955, %v954
          %v967 = vpack.c.b16 %v957, %v956
          %v968 = vpack.c.b16 %v959, %v958
          %v969 = vpack.c.b16 %v961, %v960
          %978 = vmatprep.subr.bf16.mxu0 0
          %979 = vmatpush1.bf16.msra.mxu0 %v962
          %980 = vmatprep.subr.bf16.mxu0 0
          %981 = vmatpush1.bf16.msra.mxu0 %v963
          %982 = vmatprep.subr.bf16.mxu0 0
          %983 = vmatpush1.bf16.msra.mxu0 %v964
          %984 = vmatprep.subr.bf16.mxu0 0
          %985 = vmatpush1.bf16.msra.mxu0 %v965
          %986 = vmatprep.subr.bf16.mxu0 0
          %987 = vmatpush1.bf16.msra.mxu0 %v966
          %988 = vmatprep.subr.bf16.mxu0 0
          %989 = vmatpush1.bf16.msra.mxu0 %v967
          %990 = vmatprep.subr.bf16.mxu0 0
          %991 = vmatpush1.bf16.msra.mxu0 %v968
          %992 = vmatprep.subr.bf16.mxu0 0
          %993 = vmatpush1.bf16.msra.mxu0 %v969
          %994 = vmatprep.subr.bf16.mxu0 0
          %995 = vmatpush1.bf16.msra.mxu0 0
          %996 = vmatprep.subr.bf16.mxu0 0
          %997 = vmatpush1.bf16.msra.mxu0 0
          %998 = vmatprep.subr.bf16.mxu0 0
          %999 = vmatpush1.bf16.msra.mxu0 0
          %1000 = vmatprep.subr.bf16.mxu0 0
          %1001 = vmatpush1.bf16.msra.mxu0 0
          %1002 = vmatprep.subr.bf16.mxu0 0
          %1003 = vmatpush1.bf16.msra.mxu0 0
          %1004 = vmatprep.subr.bf16.mxu0 0
          %1005 = vmatpush1.bf16.msra.mxu0 0
          %1006 = vmatprep.subr.bf16.mxu0 0
          %1007 = vmatpush1.bf16.msra.mxu0 0
          %1008 = vmatprep.subr.bf16.mxu0 0
          %1009 = vmatpush1.bf16.msra.mxu0 0
          %1010 = vmatprep.mubr.bf16.mxu0 0
          %1011 = vmatmul.mubr.bf16.gmra.mrb[0].mxu0 %v906
          %v1012 = vpop.f32.mrb[0].mxu0
          %v1013 = vadd.f32 %v928, %v1012
          %v1014 = vpop.f32.mrb[0].mxu0
          %v1015 = vpop.f32.mrb[0].mxu0
          %v1016 = vadd.f32 %v928, %v1015
          %v1017 = vpop.f32.mrb[0].mxu0
          %1018 = vdwg.mxu0
          %1019 = vst [vmem:[#allocation15] sm:$0xff] %v1013
          %1020 = vst [vmem:[#allocation15 + $0x8] sm:$0xff] %v1016
        $region84: #{tpu_custom_call.1} parent=47 // pred_fallthru
          _
        // Predicated region
        $region85: #{tpu_custom_call.1} parent=47 // pred_check
          %p1021 = pneg %p217
        $region86: #{tpu_custom_call.1} parent=47 // pred_check_branch
          %1023 = sbr.rel (%p1021) target = $region88
        $region87: #{tpu_custom_call.1} parent=47 // pred_region
          %s1024 = smul.u32 2, %s29
          %s1026 = ssub.s32 256, 256
          %1027 = vsyncadd [#allocation5], %s1026
          %s1028 = smul.addr %s1024, 128
          %s1029 = scalar_lea.hbm %s7, %s1028
          %s1030 = sshll.u32 [#allocation15], 4
          %s1031 = int_to_ptr.vmem [resolvable:$true] %s1030
          %1036 = dma.vmem_to_hbm [thread:$0]  %s1031, 256, %s1029, [#allocation5], 128, 128, 8
        $region88: #{tpu_custom_call.1} parent=47 // pred_fallthru
          _
        // Predicated region
        $region89: #{tpu_custom_call.1} parent=47 // pred_check
          %p1037 = pneg %p217
        $region90: #{tpu_custom_call.1} parent=47 // pred_check_branch
          %1039 = sbr.rel (%p1037) target = $region92
        $region91: #{tpu_custom_call.1} parent=47 // pred_region
          %1040 = dma.done [#allocation5], 256
        $region92: #{tpu_custom_call.1} parent=47 // pred_fallthru
          _
      $region48: #{tpu_custom_call.1} parent=5 // pred_fallthru
        _
      %p1041 = scmp.le.s32.totalorder 2, %s20
      // Predicated region
      $region93: #{tpu_custom_call.1} parent=5 // pred_check
        %p1042 = pneg %p1041
      $region94: #{tpu_custom_call.1} parent=5 // pred_check_branch
        %1044 = sbr.rel (%p1042) target = $region96
      $region95: #{tpu_custom_call.1} parent=5 // pred_region
        %s1045 = ssub.s32 %s20, 2
      $region96: #{tpu_custom_call.1} parent=5 // pred_fallthru
        _
    $region6: #{tpu_custom_call.1} parent=1 // loop_footer
      %s24 = sadd.s32 1, %s20
    $region7: #{tpu_custom_call.1} parent=1 // loop_footer_branch
      %19 = sbr.rel target = $region3
    $region8: #{tpu_custom_call.1} parent=1 // loop_exit
      _
    %1046 = vsyncpa [#allocation4], 1
    %s1047 = scalar_lea.sflag [#allocation4], 1
    %1048 = vsyncpa %s1047, 1
    %1049 = vsyncpa [#allocation7], 1
    %1050 = vsyncpa [#allocation10], 1
    %s1051 = scalar_lea.sflag [#allocation10], 1
    %1052 = vsyncpa %s1051, 1
    %1053 = vsyncpa [#allocation13], 1
    %1054 = vsyncpa [#allocation5], 1
    %s1055 = scalar_lea.sflag [#allocation5], 1
    %1056 = vsyncpa %s1055, 1

// kernel: tpu_custom_call.1
$region0: #{tpu_custom_call.1}
  #allocation0 [shape = 'u32[]', space=smem, size = 0x4, offset = 0x4, fixed_abs, tag = 'smem constant byte address 0x4 - core index']
  #allocation1 [shape = 'u32[144,128]{1,0:T(1,128)}', space=vmem, size = 0x12000, scoped, tag = 'internal scratch']
  #allocation2 [shape = 'f32[16,128]{1,0:T(8,128)}', space=vmem, size = 0x2000, scoped, tag = 'scratch operand']
  %s0 = inlined_call_operand.hbm [shape: bf16[16,128], index: 0, kind: input, shape index: {}]
  %s1 = inlined_call_operand.hbm [shape: bf16[128,128], index: 1, kind: input, shape index: {}]
  %s2 = inlined_call_operand.hbm [shape: f32[1,128], index: 2, kind: input, shape index: {}]
  %s3 = inlined_call_operand.hbm [shape: bf16[2,3,128,128], index: 3, kind: input, shape index: {}]
  %s4 = inlined_call_operand.hbm [shape: f32[2,3,1,128], index: 4, kind: input, shape index: {}]
  %s5 = inlined_call_operand.hbm [shape: bf16[128,128], index: 5, kind: input, shape index: {}]
  %s6 = inlined_call_operand.hbm [shape: f32[1,128], index: 6, kind: input, shape index: {}]
  %s7 = inlined_call_operand.hbm [shape: f32[16,128], index: 7, kind: output, shape index: {}]
  %s8 = sld [smem:[#allocation0]]
  $region97: #{tpu_custom_call.1} parent=0
    _
  %s10 = ssub.s32 1, %s8
  %s11 = scalar_select 0, %s10, %s8
  $region1: #{tpu_custom_call.1} parent=0
    #allocation3 [shape = 'u8[4096]{0}', space=vmem, size = 0x1000, scoped, tag = 'input window, operand 0, single buffered']
    #allocation4 [shape = 's32[2]{0}', space=sflag, size = 0x8, scoped, tag = 'scoped memory for tpu_custom_call.1']
    #allocation5 [shape = 's32[2]{0}', space=sflag, size = 0x8, scoped, tag = 'scoped memory for tpu_custom_call.1']
    #allocation6 [shape = 'u8[32768]{0}', space=vmem, size = 0x8000, scoped, tag = 'input window, operand 1, single buffered']
    #allocation7 [shape = 's32[1]{0}', space=sflag, size = 0x4, scoped, tag = 'scoped memory for tpu_custom_call.1']
    #allocation8 [shape = 'u8[512]{0}', space=vmem, size = 0x400, scoped, tag = 'input window, operand 2, single buffered']
    #allocation9 [shape = 'u8[196608]{0}', space=vmem, size = 0x30000, scoped, tag = 'input window, operand 3']
    #allocation10 [shape = 's32[2]{0}', space=sflag, size = 0x8, scoped, tag = 'scoped memory for tpu_custom_call.1']
    #allocation11 [shape = 'u8[3072]{0}', space=vmem, size = 0xc00, scoped, tag = 'input window, operand 4']
    #allocation12 [shape = 'u8[32768]{0}', space=vmem, size = 0x8000, scoped, tag = 'input window, operand 5, single buffered']
    #allocation13 [shape = 's32[1]{0}', space=sflag, size = 0x4, scoped, tag = 'scoped memory for tpu_custom_call.1']
    #allocation14 [shape = 'u8[512]{0}', space=vmem, size = 0x400, scoped, tag = 'input window, operand 6, single buffered']
    #allocation15 [shape = 'u8[8192]{0}', space=vmem, size = 0x2000, scoped, tag = 'output window, operand 0, single buffered']
    %12 = vsyncpa [#allocation4], 0
    %13 = vsyncpa [#allocation7], 0
    %14 = vsyncpa [#allocation10], 0
    %s15 = scalar_lea.sflag [#allocation10], 1
    %16 = vsyncpa %s15, 0
    %17 = vsyncpa [#allocation13], 0
    %18 = vsyncpa [#allocation5], 0
    loop: start=0, step=1, limit=4
    $region2: #{tpu_custom_call.1} parent=1 // loop_pre_header
      _
    $region3: #{tpu_custom_call.1} parent=1 // loop_header
      %s20 = sphi 0, %s24
      %p21 = scmp.ge.s32.totalorder %s20, 4
      %s27 = sphi 0, %s39
      %s28 = sphi 0, %s35
      %s29 = sphi 0, %s27
      %s30 = sphi 0, %s28
      %s31 = sphi 0, %s29
      %s32 = sphi 0, %s30
      %s42 = sphi 0, %s44
      %s45 = sphi 0, %s42
      %s46 = sphi 0, %s45
      %s62 = sphi 0, %s46
      %s66 = sphi 0, %s66
      %s68 = sphi 0, %s66
      %s69 = sphi 0, %s68
      %s83 = sphi 0, %s69
      %s87 = sphi 0, %s87
      %s89 = sphi 0, %s87
      %s90 = sphi 0, %s89
      %s104 = sphi 0, %s90
      %s110 = sphi 0, %s112
      %s113 = sphi 0, %s110
      %s114 = sphi 0, %s113
      %s130 = sphi 0, %s114
      %s136 = sphi 0, %s138
      %s139 = sphi 0, %s136
      %s140 = sphi 0, %s139
      %s156 = sphi 0, %s140
      %s160 = sphi 0, %s160
      %s162 = sphi 0, %s160
      %s163 = sphi 0, %s162
      %s177 = sphi 0, %s163
      %s181 = sphi 0, %s181
      %s183 = sphi 0, %s181
      %s184 = sphi 0, %s183
      %s198 = sphi 0, %s184
      %s204 = sphi 0, %s206
      %s207 = sphi 0, %s204
      %s208 = sphi 0, %s207
      %s224 = sphi 0, %s208
    $region4: #{tpu_custom_call.1} parent=1 // loop_header_branch
      %23 = sbr.rel (%p21) target = $region8
    $region5: #{tpu_custom_call.1} parent=1 // loop_body
      %s25 = ssub.s32 %s20, 1
      %s26 = ssub.s32 %s20, 2
      %s33 = sadd.s32 1, %s28
      %p34 = scmp.ge.s32.totalorder %s33, 2
      %s35 = scalar_select %p34, 0, %s33
      %s36 = sadd.s32 1, %s27
      %s37 = scalar_select %p34, %s36, %s27
      %p38 = scmp.ge.s32.totalorder %s37, 1
      %s39 = scalar_select %p38, 0, %s37
      %s40 = ssub.s32 %s27, %s39
      %p41 = scmp.eq.s32.totalorder %s40, 0
      %s43 = sadd.s32 %s42, 1
      %s44 = scalar_select %p41, %s42, %s43
      %p47 = pneg %p41
      %p48 = scmp.eq.s32.totalorder %s20, 1
      %p49 = por %p47, %p48
      %p50 = scmp.ne.s32.totalorder %s42, %s45
      %p51 = scmp.eq.s32.totalorder %s20, 0
      %p52 = por %p50, %p51
      %p53 = scmp.ne.s32.totalorder %s42, %s45
      %p54 = scmp.eq.s32.totalorder %s25, 1
      %p55 = por %p53, %p54
      %p56 = scmp.ne.s32.totalorder %s45, %s46
      %p57 = scmp.eq.s32.totalorder %s25, 0
      %p58 = por %p56, %p57
      %p59 = scmp.ne.s32.totalorder %s45, %s46
      %p60 = scmp.eq.s32.totalorder %s26, 1
      %p61 = por %p59, %p60
      %p63 = scmp.ne.s32.totalorder %s46, %s62
      %p64 = scmp.eq.s32.totalorder %s26, 0
      %p65 = por %p63, %p64
      %s67 = sadd.s32 %s66, 1
      %p70 = scmp.eq.s32.totalorder %s20, 1
      %p71 = scmp.ne.s32.totalorder %s66, %s68
      %p72 = scmp.eq.s32.totalorder %s20, 0
      %p73 = por %p71, %p72
      %p74 = scmp.ne.s32.totalorder %s66, %s68
      %p75 = scmp.eq.s32.totalorder %s25, 1
      %p76 = por %p74, %p75
      %p77 = scmp.ne.s32.totalorder %s68, %s69
      %p78 = scmp.eq.s32.totalorder %s25, 0
      %p79 = por %p77, %p78
      %p80 = scmp.ne.s32.totalorder %s68, %s69
      %p81 = scmp.eq.s32.totalorder %s26, 1
      %p82 = por %p80, %p81
      %p84 = scmp.ne.s32.totalorder %s69, %s83
      %p85 = scmp.eq.s32.totalorder %s26, 0
      %p86 = por %p84, %p85
      %s88 = sadd.s32 %s87, 1
      %p91 = scmp.eq.s32.totalorder %s20, 1
      %p92 = scmp.ne.s32.totalorder %s87, %s89
      %p93 = scmp.eq.s32.totalorder %s20, 0
      %p94 = por %p92, %p93
      %p95 = scmp.ne.s32.totalorder %s87, %s89
      %p96 = scmp.eq.s32.totalorder %s25, 1
      %p97 = por %p95, %p96
      %p98 = scmp.ne.s32.totalorder %s89, %s90
      %p99 = scmp.eq.s32.totalorder %s25, 0
      %p100 = por %p98, %p99
      %p101 = scmp.ne.s32.totalorder %s89, %s90
      %p102 = scmp.eq.s32.totalorder %s26, 1
      %p103 = por %p101, %p102
      %p105 = scmp.ne.s32.totalorder %s90, %s104
      %p106 = scmp.eq.s32.totalorder %s26, 0
      %p107 = por %p105, %p106
      %s108 = ssub.s32 %s28, %s35
      %p109 = scmp.eq.s32.totalorder %s108, 0
      %s111 = sadd.s32 %s110, 1
      %s112 = scalar_select %p109, %s110, %s111
      %p115 = pneg %p109
      %p116 = scmp.eq.s32.totalorder %s20, 1
      %p117 = por %p115, %p116
      %p118 = scmp.ne.s32.totalorder %s110, %s113
      %p119 = scmp.eq.s32.totalorder %s20, 0
      %p120 = por %p118, %p119
      %p121 = scmp.ne.s32.totalorder %s110, %s113
      %p122 = scmp.eq.s32.totalorder %s25, 1
      %p123 = por %p121, %p122
      %p124 = scmp.ne.s32.totalorder %s113, %s114
      %p125 = scmp.eq.s32.totalorder %s25, 0
      %p126 = por %p124, %p125
      %p127 = scmp.ne.s32.totalorder %s113, %s114
      %p128 = scmp.eq.s32.totalorder %s26, 1
      %p129 = por %p127, %p128
      %p131 = scmp.ne.s32.totalorder %s114, %s130
      %p132 = scmp.eq.s32.totalorder %s26, 0
      %p133 = por %p131, %p132
      %s134 = ssub.s32 %s28, %s35
      %p135 = scmp.eq.s32.totalorder %s134, 0
      %s137 = sadd.s32 %s136, 1
      %s138 = scalar_select %p135, %s136, %s137
      %p141 = pneg %p135
      %p142 = scmp.eq.s32.totalorder %s20, 1
      %p143 = por %p141, %p142
      %p144 = scmp.ne.s32.totalorder %s136, %s139
      %p145 = scmp.eq.s32.totalorder %s20, 0
      %p146 = por %p144, %p145
      %p147 = scmp.ne.s32.totalorder %s136, %s139
      %p148 = scmp.eq.s32.totalorder %s25, 1
      %p149 = por %p147, %p148
      %p150 = scmp.ne.s32.totalorder %s139, %s140
      %p151 = scmp.eq.s32.totalorder %s25, 0
      %p152 = por %p150, %p151
      %p153 = scmp.ne.s32.totalorder %s139, %s140
      %p154 = scmp.eq.s32.totalorder %s26, 1
      %p155 = por %p153, %p154
      %p157 = scmp.ne.s32.totalorder %s140, %s156
      %p158 = scmp.eq.s32.totalorder %s26, 0
      %p159 = por %p157, %p158
      %s161 = sadd.s32 %s160, 1
      %p164 = scmp.eq.s32.totalorder %s20, 1
      %p165 = scmp.ne.s32.totalorder %s160, %s162
      %p166 = scmp.eq.s32.totalorder %s20, 0
      %p167 = por %p165, %p166
      %p168 = scmp.ne.s32.totalorder %s160, %s162
      %p169 = scmp.eq.s32.totalorder %s25, 1
      %p170 = por %p168, %p169
      %p171 = scmp.ne.s32.totalorder %s162, %s163
      %p172 = scmp.eq.s32.totalorder %s25, 0
      %p173 = por %p171, %p172
      %p174 = scmp.ne.s32.totalorder %s162, %s163
      %p175 = scmp.eq.s32.totalorder %s26, 1
      %p176 = por %p174, %p175
      %p178 = scmp.ne.s32.totalorder %s163, %s177
      %p179 = scmp.eq.s32.totalorder %s26, 0
      %p180 = por %p178, %p179
      %s182 = sadd.s32 %s181, 1
      %p185 = scmp.eq.s32.totalorder %s20, 1
      %p186 = scmp.ne.s32.totalorder %s181, %s183
      %p187 = scmp.eq.s32.totalorder %s20, 0
      %p188 = por %p186, %p187
      %p189 = scmp.ne.s32.totalorder %s181, %s183
      %p190 = scmp.eq.s32.totalorder %s25, 1
      %p191 = por %p189, %p190
      %p192 = scmp.ne.s32.totalorder %s183, %s184
      %p193 = scmp.eq.s32.totalorder %s25, 0
      %p194 = por %p192, %p193
      %p195 = scmp.ne.s32.totalorder %s183, %s184
      %p196 = scmp.eq.s32.totalorder %s26, 1
      %p197 = por %p195, %p196
      %p199 = scmp.ne.s32.totalorder %s184, %s198
      %p200 = scmp.eq.s32.totalorder %s26, 0
      %p201 = por %p199, %p200
      %s202 = ssub.s32 %s27, %s39
      %p203 = scmp.eq.s32.totalorder %s202, 0
      %s205 = sadd.s32 %s204, 1
      %s206 = scalar_select %p203, %s204, %s205
      %p209 = pneg %p203
      %p210 = scmp.eq.s32.totalorder %s20, 1
      %p211 = por %p209, %p210
      %p212 = scmp.ne.s32.totalorder %s204, %s207
      %p213 = scmp.eq.s32.totalorder %s20, 0
      %p214 = por %p212, %p213
      %p215 = scmp.ne.s32.totalorder %s204, %s207
      %p216 = scmp.eq.s32.totalorder %s25, 1
      %p217 = por %p215, %p216
      %p218 = scmp.ne.s32.totalorder %s207, %s208
      %p219 = scmp.eq.s32.totalorder %s25, 0
      %p220 = por %p218, %p219
      %p221 = scmp.ne.s32.totalorder %s207, %s208
      %p222 = scmp.eq.s32.totalorder %s26, 1
      %p223 = por %p221, %p222
      %p225 = scmp.ne.s32.totalorder %s208, %s224
      %p226 = scmp.eq.s32.totalorder %s26, 0
      %p227 = por %p225, %p226
      %p228 = scmp.le.s32.totalorder 1, %s20
      %p229 = scmp.lt.s32.totalorder %s20, 3
      %p230 = pnand %p228, %p229
      %p231 = pneg %p230
      // Predicated region
      $region9: #{tpu_custom_call.1} parent=5 // pred_check
        _
      $region10: #{tpu_custom_call.1} parent=5 // pred_check_branch
        %233 = sbr.rel (%p230) target = $region12
      $region11: #{tpu_custom_call.1} parent=5 // pred_region
        %s234 = ssub.s32 %s20, 1
        // Predicated region
        $region13: #{tpu_custom_call.1} parent=11 // pred_check
          %p235 = pneg %p58
        $region14: #{tpu_custom_call.1} parent=11 // pred_check_branch
          %237 = sbr.rel (%p235) target = $region16
        $region15: #{tpu_custom_call.1} parent=11 // pred_region
          %s238 = smul.u32 2, %s29
          %s240 = ssub.s32 128, 128
          %241 = vsyncadd [#allocation4], %s240
          %s242 = smul.addr %s238, 64
          %s243 = scalar_lea.hbm %s0, %s242
          %s244 = sshll.u32 [#allocation3], 4
          %s245 = int_to_ptr.vmem [resolvable:$true] %s244
          %250 = dma.hbm_to_vmem [thread:$0]  %s243, 128, %s245, [#allocation4], 64, 64, 4
        $region16: #{tpu_custom_call.1} parent=11 // pred_fallthru
          _
        // Predicated region
        $region17: #{tpu_custom_call.1} parent=11 // pred_check
          %p251 = pneg %p79
        $region18: #{tpu_custom_call.1} parent=11 // pred_check_branch
          %253 = sbr.rel (%p251) target = $region20
        $region19: #{tpu_custom_call.1} parent=11 // pred_region
          %s255 = ssub.s32 1024, 1024
          %256 = vsyncadd [#allocation7], %s255
          %s257 = sshll.u32 [#allocation6], 4
          %s258 = int_to_ptr.vmem [resolvable:$true] %s257
          %263 = dma.hbm_to_vmem [thread:$0]  %s1, 1024, %s258, [#allocation7], 64, 64, 4
        $region20: #{tpu_custom_call.1} parent=11 // pred_fallthru
          _
        // Predicated region
        $region21: #{tpu_custom_call.1} parent=11 // pred_check
          %p264 = pneg %p100
        $region22: #{tpu_custom_call.1} parent=11 // pred_check_branch
          %266 = sbr.rel (%p264) target = $region24
        $region23: #{tpu_custom_call.1} parent=11 // pred_region
          %s268 = ssub.s32 16, 16
          %269 = vsyncadd [#allocation7], %s268
          %s271 = sshll.u32 [#allocation8], 4
          %s272 = int_to_ptr.vmem [resolvable:$true] %s271
          %274 = dma.hbm_to_vmem [thread:$0]  %s2, 16, %s272, [#allocation7]
        $region24: #{tpu_custom_call.1} parent=11 // pred_fallthru
          _
        // Predicated region
        $region25: #{tpu_custom_call.1} parent=11 // pred_check
          %p275 = pneg %p173
        $region26: #{tpu_custom_call.1} parent=11 // pred_check_branch
          %277 = sbr.rel (%p275) target = $region28
        $region27: #{tpu_custom_call.1} parent=11 // pred_region
          %s279 = ssub.s32 1024, 1024
          %280 = vsyncadd [#allocation13], %s279
          %s281 = sshll.u32 [#allocation12], 4
          %s282 = int_to_ptr.vmem [resolvable:$true] %s281
          %287 = dma.hbm_to_vmem [thread:$0]  %s5, 1024, %s282, [#allocation13], 64, 64, 4
        $region28: #{tpu_custom_call.1} parent=11 // pred_fallthru
          _
        // Predicated region
        $region29: #{tpu_custom_call.1} parent=11 // pred_check
          %p288 = pneg %p194
        $region30: #{tpu_custom_call.1} parent=11 // pred_check_branch
          %290 = sbr.rel (%p288) target = $region32
        $region31: #{tpu_custom_call.1} parent=11 // pred_region
          %s292 = ssub.s32 16, 16
          %293 = vsyncadd [#allocation13], %s292
          %s295 = sshll.u32 [#allocation14], 4
          %s296 = int_to_ptr.vmem [resolvable:$true] %s295
          %298 = dma.hbm_to_vmem [thread:$0]  %s6, 16, %s296, [#allocation13]
        $region32: #{tpu_custom_call.1} parent=11 // pred_fallthru
          _
      $region12: #{tpu_custom_call.1} parent=5 // pred_fallthru
        _
      %p299 = scmp.lt.s32.totalorder %s20, 2
      // Predicated region
      $region33: #{tpu_custom_call.1} parent=5 // pred_check
        %p300 = pneg %p299
      $region34: #{tpu_custom_call.1} parent=5 // pred_check_branch
        %302 = sbr.rel (%p300) target = $region36
      $region35: #{tpu_custom_call.1} parent=5 // pred_region
        // Predicated region
        $region37: #{tpu_custom_call.1} parent=35 // pred_check
          %p303 = pneg %p120
        $region38: #{tpu_custom_call.1} parent=35 // pred_check_branch
          %305 = sbr.rel (%p303) target = $region40
        $region39: #{tpu_custom_call.1} parent=35 // pred_region
          %s306 = sand.u32 %s20, 1
          %s307 = scalar_lea.sflag [#allocation10], %s306
          %s308 = sand.u32 %s110, 1
          %s309 = smul.addr %s308, 192
          %s310 = scalar_lea.vmem [#allocation9], %s309
          %s312 = ssub.s32 3072, 3072
          %313 = vsyncadd %s307, %s312
          %s314 = smul.addr %s28, 48
          %s315 = smul.addr %s314, 64
          %s316 = scalar_lea.hbm %s3, %s315
          %s317 = sshll.u32 %s310, 4
          %s318 = int_to_ptr.vmem [resolvable:$true] %s317
          %323 = dma.hbm_to_vmem [thread:$0]  %s316, 3072, %s318, %s307, 64, 64, 4
        $region40: #{tpu_custom_call.1} parent=35 // pred_fallthru
          _
        // Predicated region
        $region41: #{tpu_custom_call.1} parent=35 // pred_check
          %p324 = pneg %p146
        $region42: #{tpu_custom_call.1} parent=35 // pred_check_branch
          %326 = sbr.rel (%p324) target = $region44
        $region43: #{tpu_custom_call.1} parent=35 // pred_region
          %s327 = sand.u32 %s20, 1
          %s328 = scalar_lea.sflag [#allocation10], %s327
          %s329 = sand.u32 %s136, 1
          %s330 = smul.addr %s329, 3
          %s331 = scalar_lea.vmem [#allocation11], %s330
          %s333 = ssub.s32 48, 48
          %334 = vsyncadd %s328, %s333
          %s335 = smul.addr %s28, 3
          %s336 = smul.addr %s335, 16
          %s337 = scalar_lea.hbm %s4, %s336
          %s338 = sshll.u32 %s331, 4
          %s339 = int_to_ptr.vmem [resolvable:$true] %s338
          %344 = dma.hbm_to_vmem [thread:$0]  %s337, 48, %s339, %s328, 16, 16, 1
        $region44: #{tpu_custom_call.1} parent=35 // pred_fallthru
          _
      $region36: #{tpu_custom_call.1} parent=5 // pred_fallthru
        _
      %p345 = scmp.le.s32.totalorder 1, %s20
      %p346 = scmp.lt.s32.totalorder %s20, 3
      %p347 = pnand %p345, %p346
      %p348 = pneg %p347
      // Predicated region
      $region45: #{tpu_custom_call.1} parent=5 // pred_check
        _
      $region46: #{tpu_custom_call.1} parent=5 // pred_check_branch
        %350 = sbr.rel (%p347) target = $region48
      $region47: #{tpu_custom_call.1} parent=5 // pred_region
        %s351 = ssub.s32 %s20, 1
        // Predicated region
        $region49: #{tpu_custom_call.1} parent=47 // pred_check
          %p352 = pneg %p58
        $region50: #{tpu_custom_call.1} parent=47 // pred_check_branch
          %354 = sbr.rel (%p352) target = $region52
        $region51: #{tpu_custom_call.1} parent=47 // pred_region
          %355 = dma.done [#allocation4], 128
        $region52: #{tpu_custom_call.1} parent=47 // pred_fallthru
          _
        // Predicated region
        $region53: #{tpu_custom_call.1} parent=47 // pred_check
          %p356 = pneg %p79
        $region54: #{tpu_custom_call.1} parent=47 // pred_check_branch
          %358 = sbr.rel (%p356) target = $region56
        $region55: #{tpu_custom_call.1} parent=47 // pred_region
          %359 = dma.done [#allocation7], 1024
        $region56: #{tpu_custom_call.1} parent=47 // pred_fallthru
          _
        // Predicated region
        $region57: #{tpu_custom_call.1} parent=47 // pred_check
          %p360 = pneg %p100
        $region58: #{tpu_custom_call.1} parent=47 // pred_check_branch
          %362 = sbr.rel (%p360) target = $region60
        $region59: #{tpu_custom_call.1} parent=47 // pred_region
          %363 = dma.done [#allocation7], 16
        $region60: #{tpu_custom_call.1} parent=47 // pred_fallthru
          _
        %s364 = sand.u32 %s25, 1
        %s365 = scalar_lea.sflag [#allocation10], %s364
        %s366 = sand.u32 %s113, 1
        %s367 = smul.addr %s366, 192
        %s368 = scalar_lea.vmem [#allocation9], %s367
        // Predicated region
        $region61: #{tpu_custom_call.1} parent=47 // pred_check
          %p369 = pneg %p126
        $region62: #{tpu_custom_call.1} parent=47 // pred_check_branch
          %371 = sbr.rel (%p369) target = $region64
        $region63: #{tpu_custom_call.1} parent=47 // pred_region
          %372 = dma.done %s365, 3072
        $region64: #{tpu_custom_call.1} parent=47 // pred_fallthru
          _
        %s373 = sand.u32 %s25, 1
        %s374 = scalar_lea.sflag [#allocation10], %s373
        %s375 = sand.u32 %s139, 1
        %s376 = smul.addr %s375, 3
        %s377 = scalar_lea.vmem [#allocation11], %s376
        // Predicated region
        $region65: #{tpu_custom_call.1} parent=47 // pred_check
          %p378 = pneg %p152
        $region66: #{tpu_custom_call.1} parent=47 // pred_check_branch
          %380 = sbr.rel (%p378) target = $region68
        $region67: #{tpu_custom_call.1} parent=47 // pred_region
          %381 = dma.done %s374, 48
        $region68: #{tpu_custom_call.1} parent=47 // pred_fallthru
          _
        // Predicated region
        $region69: #{tpu_custom_call.1} parent=47 // pred_check
          %p382 = pneg %p173
        $region70: #{tpu_custom_call.1} parent=47 // pred_check_branch
          %384 = sbr.rel (%p382) target = $region72
        $region71: #{tpu_custom_call.1} parent=47 // pred_region
          %385 = dma.done [#allocation13], 1024
        $region72: #{tpu_custom_call.1} parent=47 // pred_fallthru
          _
        // Predicated region
        $region73: #{tpu_custom_call.1} parent=47 // pred_check
          %p386 = pneg %p194
        $region74: #{tpu_custom_call.1} parent=47 // pred_check_branch
          %388 = sbr.rel (%p386) target = $region76
        $region75: #{tpu_custom_call.1} parent=47 // pred_region
          %389 = dma.done [#allocation13], 16
        $region76: #{tpu_custom_call.1} parent=47 // pred_fallthru
          _
        %p390 = pneg %p58
        %p391 = pneg %p55
        %p392 = pneg %p79
        %p393 = pneg %p76
        %p394 = pneg %p100
        %p395 = pneg %p97
        %s396 = sand.u32 %s25, 1
        %s397 = scalar_lea.sflag [#allocation10], %s396
        %s398 = sand.u32 %s113, 1
        %s399 = smul.addr %s398, 192
        %s400 = scalar_lea.vmem [#allocation9], %s399
        %p401 = pneg %p126
        %p402 = pneg %p123
        %s403 = sand.u32 %s25, 1
        %s404 = scalar_lea.sflag [#allocation10], %s403
        %s405 = sand.u32 %s139, 1
        %s406 = smul.addr %s405, 3
        %s407 = scalar_lea.vmem [#allocation11], %s406
        %p408 = pneg %p152
        %p409 = pneg %p149
        %p410 = pneg %p173
        %p411 = pneg %p170
        %p412 = pneg %p194
        %p413 = pneg %p191
        %p414 = pneg %p220
        %p415 = pneg %p217
        %s416 = smul.u32 2, %s29
        %s417 = smul.u32 2, %s29
        %p419 = scmp.eq.s32.totalorder %s30, 0
        // Predicated region
        $region77: #{tpu_custom_call.1} parent=47 // pred_check
          %p420 = pneg %p419
        $region78: #{tpu_custom_call.1} parent=47 // pred_check_branch
          %422 = sbr.rel (%p420) target = $region80
        $region79: #{tpu_custom_call.1} parent=47 // pred_region
          %v423 = vld [vmem:[#allocation3] sm:$0xf]
          %v424 = vld [vmem:[#allocation3 + $0x4] sm:$0xf]
          %v425 = vld [vmem:[#allocation6] sm:$0xf]
          %v426 = vld [vmem:[#allocation6 + $0x4] sm:$0xf]
          %v427 = vld [vmem:[#allocation6 + $0x8] sm:$0xf]
          %v428 = vld [vmem:[#allocation6 + $0xc] sm:$0xf]
          %v429 = vld [vmem:[#allocation6 + $0x10] sm:$0xf]
          %v430 = vld [vmem:[#allocation6 + $0x14] sm:$0xf]
          %v431 = vld [vmem:[#allocation6 + $0x18] sm:$0xf]
          %v432 = vld [vmem:[#allocation6 + $0x1c] sm:$0xf]
          %v433 = vld [vmem:[#allocation6 + $0x20] sm:$0xf]
          %v434 = vld [vmem:[#allocation6 + $0x24] sm:$0xf]
          %v435 = vld [vmem:[#allocation6 + $0x28] sm:$0xf]
          %v436 = vld [vmem:[#allocation6 + $0x2c] sm:$0xf]
          %v437 = vld [vmem:[#allocation6 + $0x30] sm:$0xf]
          %v438 = vld [vmem:[#allocation6 + $0x34] sm:$0xf]
          %v439 = vld [vmem:[#allocation6 + $0x38] sm:$0xf]
          %v440 = vld [vmem:[#allocation6 + $0x3c] sm:$0xf]
          %v441 = vld [vmem:[#allocation8] sm:$0x1]
          %v443 = vlaneseq
          %v444 = vshrl.u32 %v443, 7
          %v445 = vsub.s32 0, %v444
          %v446 = vrot.slane %v441, %v445
          %v450 = vunpack.c.l.b16 %v423
          %v451 = vunpack.c.l.b16 %v424
          %v452 = vpack.c.b16 %v451, %v450
          %v470 = vunpack.c.l.b16 %v425
          %v471 = vunpack.c.l.b16 %v426
          %v472 = vunpack.c.l.b16 %v427
          %v473 = vunpack.c.l.b16 %v428
          %v474 = vunpack.c.l.b16 %v429
          %v475 = vunpack.c.l.b16 %v430
          %v476 = vunpack.c.l.b16 %v431
          %v477 = vunpack.c.l.b16 %v432
          %v478 = vunpack.c.l.b16 %v433
          %v479 = vunpack.c.l.b16 %v434
          %v480 = vunpack.c.l.b16 %v435
          %v481 = vunpack.c.l.b16 %v436
          %v482 = vunpack.c.l.b16 %v437
          %v483 = vunpack.c.l.b16 %v438
          %v484 = vunpack.c.l.b16 %v439
          %v485 = vunpack.c.l.b16 %v440
          %v486 = vpack.c.b16 %v471, %v470
          %v487 = vpack.c.b16 %v473, %v472
          %v488 = vpack.c.b16 %v475, %v474
          %v489 = vpack.c.b16 %v477, %v476
          %v490 = vpack.c.b16 %v479, %v478
          %v491 = vpack.c.b16 %v481, %v480
          %v492 = vpack.c.b16 %v483, %v482
          %v493 = vpack.c.b16 %v485, %v484
          %502 = vmatprep.subr.bf16.mxu0 0
          %503 = vmatpush1.bf16.msra.mxu0 %v486
          %504 = vmatprep.subr.bf16.mxu0 0
          %505 = vmatpush1.bf16.msra.mxu0 %v487
          %506 = vmatprep.subr.bf16.mxu0 0
          %507 = vmatpush1.bf16.msra.mxu0 %v488
          %508 = vmatprep.subr.bf16.mxu0 0
          %509 = vmatpush1.bf16.msra.mxu0 %v489
          %510 = vmatprep.subr.bf16.mxu0 0
          %511 = vmatpush1.bf16.msra.mxu0 %v490
          %512 = vmatprep.subr.bf16.mxu0 0
          %513 = vmatpush1.bf16.msra.mxu0 %v491
          %514 = vmatprep.subr.bf16.mxu0 0
          %515 = vmatpush1.bf16.msra.mxu0 %v492
          %516 = vmatprep.subr.bf16.mxu0 0
          %517 = vmatpush1.bf16.msra.mxu0 %v493
          %518 = vmatprep.subr.bf16.mxu0 0
          %519 = vmatpush1.bf16.msra.mxu0 0
          %520 = vmatprep.subr.bf16.mxu0 0
          %521 = vmatpush1.bf16.msra.mxu0 0
          %522 = vmatprep.subr.bf16.mxu0 0
          %523 = vmatpush1.bf16.msra.mxu0 0
          %524 = vmatprep.subr.bf16.mxu0 0
          %525 = vmatpush1.bf16.msra.mxu0 0
          %526 = vmatprep.subr.bf16.mxu0 0
          %527 = vmatpush1.bf16.msra.mxu0 0
          %528 = vmatprep.subr.bf16.mxu0 0
          %529 = vmatpush1.bf16.msra.mxu0 0
          %530 = vmatprep.subr.bf16.mxu0 0
          %531 = vmatpush1.bf16.msra.mxu0 0
          %532 = vmatprep.subr.bf16.mxu0 0
          %533 = vmatpush1.bf16.msra.mxu0 0
          %534 = vmatprep.mubr.bf16.mxu0 0
          %535 = vmatmul.mubr.bf16.gmra.mrb[0].mxu0 %v452
          %v536 = vpop.f32.mrb[0].mxu0
          %v537 = vadd.f32 %v446, %v536
          %v538 = vpop.f32.mrb[0].mxu0
          %v539 = vpop.f32.mrb[0].mxu0
          %v540 = vadd.f32 %v446, %v539
          %v541 = vpop.f32.mrb[0].mxu0
          %542 = vdwg.mxu0
          %v543 = vmax.f32 %v537, 0.0
          %v544 = vmax.f32 %v540, 0.0
          %545 = vst [vmem:[#allocation2] sm:$0xff] %v543
          %546 = vst [vmem:[#allocation2 + $0x8] sm:$0xff] %v544
        $region80: #{tpu_custom_call.1} parent=47 // pred_fallthru
          _
        %v547 = vld [vmem:[#allocation2] sm:$0xff]
        %v548 = vld [vmem:[#allocation2 + $0x8] sm:$0xff]
        %v549 = vpack.c.bf16 %v548, %v547
        %v550 = vld [vmem:[%s368] sm:$0xf]
        %v551 = vld [vmem:[%s368 + $0x4] sm:$0xf]
        %v552 = vld [vmem:[%s368 + $0x8] sm:$0xf]
        %v553 = vld [vmem:[%s368 + $0xc] sm:$0xf]
        %v554 = vld [vmem:[%s368 + $0x10] sm:$0xf]
        %v555 = vld [vmem:[%s368 + $0x14] sm:$0xf]
        %v556 = vld [vmem:[%s368 + $0x18] sm:$0xf]
        %v557 = vld [vmem:[%s368 + $0x1c] sm:$0xf]
        %v558 = vld [vmem:[%s368 + $0x20] sm:$0xf]
        %v559 = vld [vmem:[%s368 + $0x24] sm:$0xf]
        %v560 = vld [vmem:[%s368 + $0x28] sm:$0xf]
        %v561 = vld [vmem:[%s368 + $0x2c] sm:$0xf]
        %v562 = vld [vmem:[%s368 + $0x30] sm:$0xf]
        %v563 = vld [vmem:[%s368 + $0x34] sm:$0xf]
        %v564 = vld [vmem:[%s368 + $0x38] sm:$0xf]
        %v565 = vld [vmem:[%s368 + $0x3c] sm:$0xf]
        %v566 = vld [vmem:[%s377] sm:$0x1]
        %v568 = vlaneseq
        %v569 = vshrl.u32 %v568, 7
        %v570 = vsub.s32 0, %v569
        %v571 = vrot.slane %v566, %v570
        %v589 = vunpack.c.l.b16 %v550
        %v590 = vunpack.c.l.b16 %v551
        %v591 = vunpack.c.l.b16 %v552
        %v592 = vunpack.c.l.b16 %v553
        %v593 = vunpack.c.l.b16 %v554
        %v594 = vunpack.c.l.b16 %v555
        %v595 = vunpack.c.l.b16 %v556
        %v596 = vunpack.c.l.b16 %v557
        %v597 = vunpack.c.l.b16 %v558
        %v598 = vunpack.c.l.b16 %v559
        %v599 = vunpack.c.l.b16 %v560
        %v600 = vunpack.c.l.b16 %v561
        %v601 = vunpack.c.l.b16 %v562
        %v602 = vunpack.c.l.b16 %v563
        %v603 = vunpack.c.l.b16 %v564
        %v604 = vunpack.c.l.b16 %v565
        %v605 = vpack.c.b16 %v590, %v589
        %v606 = vpack.c.b16 %v592, %v591
        %v607 = vpack.c.b16 %v594, %v593
        %v608 = vpack.c.b16 %v596, %v595
        %v609 = vpack.c.b16 %v598, %v597
        %v610 = vpack.c.b16 %v600, %v599
        %v611 = vpack.c.b16 %v602, %v601
        %v612 = vpack.c.b16 %v604, %v603
        %621 = vmatprep.subr.bf16.mxu0 0
        %622 = vmatpush1.bf16.msra.mxu0 %v605
        %623 = vmatprep.subr.bf16.mxu0 0
        %624 = vmatpush1.bf16.msra.mxu0 %v606
        %625 = vmatprep.subr.bf16.mxu0 0
        %626 = vmatpush1.bf16.msra.mxu0 %v607
        %627 = vmatprep.subr.bf16.mxu0 0
        %628 = vmatpush1.bf16.msra.mxu0 %v608
        %629 = vmatprep.subr.bf16.mxu0 0
        %630 = vmatpush1.bf16.msra.mxu0 %v609
        %631 = vmatprep.subr.bf16.mxu0 0
        %632 = vmatpush1.bf16.msra.mxu0 %v610
        %633 = vmatprep.subr.bf16.mxu0 0
        %634 = vmatpush1.bf16.msra.mxu0 %v611
        %635 = vmatprep.subr.bf16.mxu0 0
        %636 = vmatpush1.bf16.msra.mxu0 %v612
        %637 = vmatprep.subr.bf16.mxu0 0
        %638 = vmatpush1.bf16.msra.mxu0 0
        %639 = vmatprep.subr.bf16.mxu0 0
        %640 = vmatpush1.bf16.msra.mxu0 0
        %641 = vmatprep.subr.bf16.mxu0 0
        %642 = vmatpush1.bf16.msra.mxu0 0
        %643 = vmatprep.subr.bf16.mxu0 0
        %644 = vmatpush1.bf16.msra.mxu0 0
        %645 = vmatprep.subr.bf16.mxu0 0
        %646 = vmatpush1.bf16.msra.mxu0 0
        %647 = vmatprep.subr.bf16.mxu0 0
        %648 = vmatpush1.bf16.msra.mxu0 0
        %649 = vmatprep.subr.bf16.mxu0 0
        %650 = vmatpush1.bf16.msra.mxu0 0
        %651 = vmatprep.subr.bf16.mxu0 0
        %652 = vmatpush1.bf16.msra.mxu0 0
        %653 = vmatprep.mubr.bf16.mxu0 0
        %654 = vmatmul.mubr.bf16.gmra.mrb[0].mxu0 %v549
        %v655 = vpop.f32.mrb[0].mxu0
        %v656 = vadd.f32 %v571, %v655
        %v657 = vpop.f32.mrb[0].mxu0
        %v658 = vpop.f32.mrb[0].mxu0
        %v659 = vadd.f32 %v571, %v658
        %v660 = vpop.f32.mrb[0].mxu0
        %661 = vdwg.mxu0
        %v662 = vmax.f32 %v656, 0.0
        %v663 = vmax.f32 %v659, 0.0
        %v664 = vpack.c.bf16 %v663, %v662
        %s665 = scalar_lea.vmem %s368, 64 [#allocation9]
        %v666 = vld [vmem:[%s665] sm:$0xf]
        %v667 = vld [vmem:[%s665 + $0x4] sm:$0xf]
        %v668 = vld [vmem:[%s665 + $0x8] sm:$0xf]
        %v669 = vld [vmem:[%s665 + $0xc] sm:$0xf]
        %v670 = vld [vmem:[%s665 + $0x10] sm:$0xf]
        %v671 = vld [vmem:[%s665 + $0x14] sm:$0xf]
        %v672 = vld [vmem:[%s665 + $0x18] sm:$0xf]
        %v673 = vld [vmem:[%s665 + $0x1c] sm:$0xf]
        %v674 = vld [vmem:[%s665 + $0x20] sm:$0xf]
        %v675 = vld [vmem:[%s665 + $0x24] sm:$0xf]
        %v676 = vld [vmem:[%s665 + $0x28] sm:$0xf]
        %v677 = vld [vmem:[%s665 + $0x2c] sm:$0xf]
        %v678 = vld [vmem:[%s665 + $0x30] sm:$0xf]
        %v679 = vld [vmem:[%s665 + $0x34] sm:$0xf]
        %v680 = vld [vmem:[%s665 + $0x38] sm:$0xf]
        %v681 = vld [vmem:[%s665 + $0x3c] sm:$0xf]
        %s682 = scalar_lea.vmem %s377, 1 [#allocation11]
        %v683 = vld [vmem:[%s682] sm:$0x1]
        %v685 = vlaneseq
        %v686 = vshrl.u32 %v685, 7
        %v687 = vsub.s32 0, %v686
        %v688 = vrot.slane %v683, %v687
        %v706 = vunpack.c.l.b16 %v666
        %v707 = vunpack.c.l.b16 %v667
        %v708 = vunpack.c.l.b16 %v668
        %v709 = vunpack.c.l.b16 %v669
        %v710 = vunpack.c.l.b16 %v670
        %v711 = vunpack.c.l.b16 %v671
        %v712 = vunpack.c.l.b16 %v672
        %v713 = vunpack.c.l.b16 %v673
        %v714 = vunpack.c.l.b16 %v674
        %v715 = vunpack.c.l.b16 %v675
        %v716 = vunpack.c.l.b16 %v676
        %v717 = vunpack.c.l.b16 %v677
        %v718 = vunpack.c.l.b16 %v678
        %v719 = vunpack.c.l.b16 %v679
        %v720 = vunpack.c.l.b16 %v680
        %v721 = vunpack.c.l.b16 %v681
        %v722 = vpack.c.b16 %v707, %v706
        %v723 = vpack.c.b16 %v709, %v708
        %v724 = vpack.c.b16 %v711, %v710
        %v725 = vpack.c.b16 %v713, %v712
        %v726 = vpack.c.b16 %v715, %v714
        %v727 = vpack.c.b16 %v717, %v716
        %v728 = vpack.c.b16 %v719, %v718
        %v729 = vpack.c.b16 %v721, %v720
        %738 = vmatprep.subr.bf16.mxu0 0
        %739 = vmatpush1.bf16.msra.mxu0 %v722
        %740 = vmatprep.subr.bf16.mxu0 0
        %741 = vmatpush1.bf16.msra.mxu0 %v723
        %742 = vmatprep.subr.bf16.mxu0 0
        %743 = vmatpush1.bf16.msra.mxu0 %v724
        %744 = vmatprep.subr.bf16.mxu0 0
        %745 = vmatpush1.bf16.msra.mxu0 %v725
        %746 = vmatprep.subr.bf16.mxu0 0
        %747 = vmatpush1.bf16.msra.mxu0 %v726
        %748 = vmatprep.subr.bf16.mxu0 0
        %749 = vmatpush1.bf16.msra.mxu0 %v727
        %750 = vmatprep.subr.bf16.mxu0 0
        %751 = vmatpush1.bf16.msra.mxu0 %v728
        %752 = vmatprep.subr.bf16.mxu0 0
        %753 = vmatpush1.bf16.msra.mxu0 %v729
        %754 = vmatprep.subr.bf16.mxu0 0
        %755 = vmatpush1.bf16.msra.mxu0 0
        %756 = vmatprep.subr.bf16.mxu0 0
        %757 = vmatpush1.bf16.msra.mxu0 0
        %758 = vmatprep.subr.bf16.mxu0 0
        %759 = vmatpush1.bf16.msra.mxu0 0
        %760 = vmatprep.subr.bf16.mxu0 0
        %761 = vmatpush1.bf16.msra.mxu0 0
        %762 = vmatprep.subr.bf16.mxu0 0
        %763 = vmatpush1.bf16.msra.mxu0 0
        %764 = vmatprep.subr.bf16.mxu0 0
        %765 = vmatpush1.bf16.msra.mxu0 0
        %766 = vmatprep.subr.bf16.mxu0 0
        %767 = vmatpush1.bf16.msra.mxu0 0
        %768 = vmatprep.subr.bf16.mxu0 0
        %769 = vmatpush1.bf16.msra.mxu0 0
        %770 = vmatprep.mubr.bf16.mxu0 0
        %771 = vmatmul.mubr.bf16.gmra.mrb[0].mxu0 %v664
        %v772 = vpop.f32.mrb[0].mxu0
        %v773 = vadd.f32 %v688, %v772
        %v774 = vpop.f32.mrb[0].mxu0
        %v775 = vpop.f32.mrb[0].mxu0
        %v776 = vadd.f32 %v688, %v775
        %v777 = vpop.f32.mrb[0].mxu0
        %778 = vdwg.mxu0
        %v779 = vmax.f32 %v773, 0.0
        %v780 = vmax.f32 %v776, 0.0
        %v781 = vpack.c.bf16 %v780, %v779
        %s782 = scalar_lea.vmem %s368, 128 [#allocation9]
        %v783 = vld [vmem:[%s782] sm:$0xf]
        %v784 = vld [vmem:[%s782 + $0x4] sm:$0xf]
        %v785 = vld [vmem:[%s782 + $0x8] sm:$0xf]
        %v786 = vld [vmem:[%s782 + $0xc] sm:$0xf]
        %v787 = vld [vmem:[%s782 + $0x10] sm:$0xf]
        %v788 = vld [vmem:[%s782 + $0x14] sm:$0xf]
        %v789 = vld [vmem:[%s782 + $0x18] sm:$0xf]
        %v790 = vld [vmem:[%s782 + $0x1c] sm:$0xf]
        %v791 = vld [vmem:[%s782 + $0x20] sm:$0xf]
        %v792 = vld [vmem:[%s782 + $0x24] sm:$0xf]
        %v793 = vld [vmem:[%s782 + $0x28] sm:$0xf]
        %v794 = vld [vmem:[%s782 + $0x2c] sm:$0xf]
        %v795 = vld [vmem:[%s782 + $0x30] sm:$0xf]
        %v796 = vld [vmem:[%s782 + $0x34] sm:$0xf]
        %v797 = vld [vmem:[%s782 + $0x38] sm:$0xf]
        %v798 = vld [vmem:[%s782 + $0x3c] sm:$0xf]
        %s799 = scalar_lea.vmem %s377, 2 [#allocation11]
        %v800 = vld [vmem:[%s799] sm:$0x1]
        %v802 = vlaneseq
        %v803 = vshrl.u32 %v802, 7
        %v804 = vsub.s32 0, %v803
        %v805 = vrot.slane %v800, %v804
        %v823 = vunpack.c.l.b16 %v783
        %v824 = vunpack.c.l.b16 %v784
        %v825 = vunpack.c.l.b16 %v785
        %v826 = vunpack.c.l.b16 %v786
        %v827 = vunpack.c.l.b16 %v787
        %v828 = vunpack.c.l.b16 %v788
        %v829 = vunpack.c.l.b16 %v789
        %v830 = vunpack.c.l.b16 %v790
        %v831 = vunpack.c.l.b16 %v791
        %v832 = vunpack.c.l.b16 %v792
        %v833 = vunpack.c.l.b16 %v793
        %v834 = vunpack.c.l.b16 %v794
        %v835 = vunpack.c.l.b16 %v795
        %v836 = vunpack.c.l.b16 %v796
        %v837 = vunpack.c.l.b16 %v797
        %v838 = vunpack.c.l.b16 %v798
        %v839 = vpack.c.b16 %v824, %v823
        %v840 = vpack.c.b16 %v826, %v825
        %v841 = vpack.c.b16 %v828, %v827
        %v842 = vpack.c.b16 %v830, %v829
        %v843 = vpack.c.b16 %v832, %v831
        %v844 = vpack.c.b16 %v834, %v833
        %v845 = vpack.c.b16 %v836, %v835
        %v846 = vpack.c.b16 %v838, %v837
        %855 = vmatprep.subr.bf16.mxu0 0
        %856 = vmatpush1.bf16.msra.mxu0 %v839
        %857 = vmatprep.subr.bf16.mxu0 0
        %858 = vmatpush1.bf16.msra.mxu0 %v840
        %859 = vmatprep.subr.bf16.mxu0 0
        %860 = vmatpush1.bf16.msra.mxu0 %v841
        %861 = vmatprep.subr.bf16.mxu0 0
        %862 = vmatpush1.bf16.msra.mxu0 %v842
        %863 = vmatprep.subr.bf16.mxu0 0
        %864 = vmatpush1.bf16.msra.mxu0 %v843
        %865 = vmatprep.subr.bf16.mxu0 0
        %866 = vmatpush1.bf16.msra.mxu0 %v844
        %867 = vmatprep.subr.bf16.mxu0 0
        %868 = vmatpush1.bf16.msra.mxu0 %v845
        %869 = vmatprep.subr.bf16.mxu0 0
        %870 = vmatpush1.bf16.msra.mxu0 %v846
        %871 = vmatprep.subr.bf16.mxu0 0
        %872 = vmatpush1.bf16.msra.mxu0 0
        %873 = vmatprep.subr.bf16.mxu0 0
        %874 = vmatpush1.bf16.msra.mxu0 0
        %875 = vmatprep.subr.bf16.mxu0 0
        %876 = vmatpush1.bf16.msra.mxu0 0
        %877 = vmatprep.subr.bf16.mxu0 0
        %878 = vmatpush1.bf16.msra.mxu0 0
        %879 = vmatprep.subr.bf16.mxu0 0
        %880 = vmatpush1.bf16.msra.mxu0 0
        %881 = vmatprep.subr.bf16.mxu0 0
        %882 = vmatpush1.bf16.msra.mxu0 0
        %883 = vmatprep.subr.bf16.mxu0 0
        %884 = vmatpush1.bf16.msra.mxu0 0
        %885 = vmatprep.subr.bf16.mxu0 0
        %886 = vmatpush1.bf16.msra.mxu0 0
        %887 = vmatprep.mubr.bf16.mxu0 0
        %888 = vmatmul.mubr.bf16.gmra.mrb[0].mxu0 %v781
        %v889 = vpop.f32.mrb[0].mxu0
        %v890 = vadd.f32 %v805, %v889
        %v891 = vpop.f32.mrb[0].mxu0
        %v892 = vpop.f32.mrb[0].mxu0
        %v893 = vadd.f32 %v805, %v892
        %v894 = vpop.f32.mrb[0].mxu0
        %895 = vdwg.mxu0
        %v896 = vadd.f32 %v890, %v547
        %v897 = vadd.f32 %v893, %v548
        %v898 = vmax.f32 %v896, 0.0
        %v899 = vmax.f32 %v897, 0.0
        %900 = vst [vmem:[#allocation2] sm:$0xff] %v898
        %901 = vst [vmem:[#allocation2 + $0x8] sm:$0xff] %v899
        %p902 = scmp.eq.s32.totalorder %s30, 1
        // Predicated region
        $region81: #{tpu_custom_call.1} parent=47 // pred_check
          %p903 = pneg %p902
        $region82: #{tpu_custom_call.1} parent=47 // pred_check_branch
          %905 = sbr.rel (%p903) target = $region84
        $region83: #{tpu_custom_call.1} parent=47 // pred_region
          %v906 = vpack.c.bf16 %v899, %v898
          %v907 = vld [vmem:[#allocation12] sm:$0xf]
          %v908 = vld [vmem:[#allocation12 + $0x4] sm:$0xf]
          %v909 = vld [vmem:[#allocation12 + $0x8] sm:$0xf]
          %v910 = vld [vmem:[#allocation12 + $0xc] sm:$0xf]
          %v911 = vld [vmem:[#allocation12 + $0x10] sm:$0xf]
          %v912 = vld [vmem:[#allocation12 + $0x14] sm:$0xf]
          %v913 = vld [vmem:[#allocation12 + $0x18] sm:$0xf]
          %v914 = vld [vmem:[#allocation12 + $0x1c] sm:$0xf]
          %v915 = vld [vmem:[#allocation12 + $0x20] sm:$0xf]
          %v916 = vld [vmem:[#allocation12 + $0x24] sm:$0xf]
          %v917 = vld [vmem:[#allocation12 + $0x28] sm:$0xf]
          %v918 = vld [vmem:[#allocation12 + $0x2c] sm:$0xf]
          %v919 = vld [vmem:[#allocation12 + $0x30] sm:$0xf]
          %v920 = vld [vmem:[#allocation12 + $0x34] sm:$0xf]
          %v921 = vld [vmem:[#allocation12 + $0x38] sm:$0xf]
          %v922 = vld [vmem:[#allocation12 + $0x3c] sm:$0xf]
          %v923 = vld [vmem:[#allocation14] sm:$0x1]
          %v925 = vlaneseq
          %v926 = vshrl.u32 %v925, 7
          %v927 = vsub.s32 0, %v926
          %v928 = vrot.slane %v923, %v927
          %v946 = vunpack.c.l.b16 %v907
          %v947 = vunpack.c.l.b16 %v908
          %v948 = vunpack.c.l.b16 %v909
          %v949 = vunpack.c.l.b16 %v910
          %v950 = vunpack.c.l.b16 %v911
          %v951 = vunpack.c.l.b16 %v912
          %v952 = vunpack.c.l.b16 %v913
          %v953 = vunpack.c.l.b16 %v914
          %v954 = vunpack.c.l.b16 %v915
          %v955 = vunpack.c.l.b16 %v916
          %v956 = vunpack.c.l.b16 %v917
          %v957 = vunpack.c.l.b16 %v918
          %v958 = vunpack.c.l.b16 %v919
          %v959 = vunpack.c.l.b16 %v920
          %v960 = vunpack.c.l.b16 %v921
          %v961 = vunpack.c.l.b16 %v922
          %v962 = vpack.c.b16 %v947, %v946
          %v963 = vpack.c.b16 %v949, %v948
          %v964 = vpack.c.b16 %v951, %v950
          %v965 = vpack.c.b16 %v953, %v952
          %v966 = vpack.c.b16 %v955, %v954
          %v967 = vpack.c.b16 %v957, %v956
          %v968 = vpack.c.b16 %v959, %v958
          %v969 = vpack.c.b16 %v961, %v960
          %978 = vmatprep.subr.bf16.mxu0 0
          %979 = vmatpush1.bf16.msra.mxu0 %v962
          %980 = vmatprep.subr.bf16.mxu0 0
          %981 = vmatpush1.bf16.msra.mxu0 %v963
          %982 = vmatprep.subr.bf16.mxu0 0
          %983 = vmatpush1.bf16.msra.mxu0 %v964
          %984 = vmatprep.subr.bf16.mxu0 0
          %985 = vmatpush1.bf16.msra.mxu0 %v965
          %986 = vmatprep.subr.bf16.mxu0 0
          %987 = vmatpush1.bf16.msra.mxu0 %v966
          %988 = vmatprep.subr.bf16.mxu0 0
          %989 = vmatpush1.bf16.msra.mxu0 %v967
          %990 = vmatprep.subr.bf16.mxu0 0
          %991 = vmatpush1.bf16.msra.mxu0 %v968
          %992 = vmatprep.subr.bf16.mxu0 0
          %993 = vmatpush1.bf16.msra.mxu0 %v969
          %994 = vmatprep.subr.bf16.mxu0 0
          %995 = vmatpush1.bf16.msra.mxu0 0
          %996 = vmatprep.subr.bf16.mxu0 0
          %997 = vmatpush1.bf16.msra.mxu0 0
          %998 = vmatprep.subr.bf16.mxu0 0
          %999 = vmatpush1.bf16.msra.mxu0 0
          %1000 = vmatprep.subr.bf16.mxu0 0
          %1001 = vmatpush1.bf16.msra.mxu0 0
          %1002 = vmatprep.subr.bf16.mxu0 0
          %1003 = vmatpush1.bf16.msra.mxu0 0
          %1004 = vmatprep.subr.bf16.mxu0 0
          %1005 = vmatpush1.bf16.msra.mxu0 0
          %1006 = vmatprep.subr.bf16.mxu0 0
          %1007 = vmatpush1.bf16.msra.mxu0 0
          %1008 = vmatprep.subr.bf16.mxu0 0
          %1009 = vmatpush1.bf16.msra.mxu0 0
          %1010 = vmatprep.mubr.bf16.mxu0 0
          %1011 = vmatmul.mubr.bf16.gmra.mrb[0].mxu0 %v906
          %v1012 = vpop.f32.mrb[0].mxu0
          %v1013 = vadd.f32 %v928, %v1012
          %v1014 = vpop.f32.mrb[0].mxu0
          %v1015 = vpop.f32.mrb[0].mxu0
          %v1016 = vadd.f32 %v928, %v1015
          %v1017 = vpop.f32.mrb[0].mxu0
          %1018 = vdwg.mxu0
          %1019 = vst [vmem:[#allocation15] sm:$0xff] %v1013
          %1020 = vst [vmem:[#allocation15 + $0x8] sm:$0xff] %v1016
        $region84: #{tpu_custom_call.1} parent=47 // pred_fallthru
          _
        // Predicated region
        $region85: #{tpu_custom_call.1} parent=47 // pred_check
          %p1021 = pneg %p217
        $region86: #{tpu_custom_call.1} parent=47 // pred_check_branch
          %1023 = sbr.rel (%p1021) target = $region88
        $region87: #{tpu_custom_call.1} parent=47 // pred_region
          %s1024 = smul.u32 2, %s29
          %s1026 = ssub.s32 256, 256
          %1027 = vsyncadd [#allocation5], %s1026
          %s1028 = smul.addr %s1024, 128
          %s1029 = scalar_lea.hbm %s7, %s1028
          %s1030 = sshll.u32 [#allocation15], 4
          %s1031 = int_to_ptr.vmem [resolvable:$true] %s1030
          %1036 = dma.vmem_to_hbm [thread:$0]  %s1031, 256, %s1029, [#allocation5], 128, 128, 8
        $region88: #{tpu_custom_call.1} parent=47 // pred_fallthru
          _
        // Predicated region
        $region89: #{tpu_custom_call.1} parent=47 // pred_check
          %p1037 = pneg %p217
        $region90: #{tpu_custom_call.1} parent=47 // pred_check_branch
          %1039 = sbr.rel (%p1037) target = $region92
        $region91: #{tpu_custom_call.1} parent=47 // pred_region
          %1040 = dma.done [#allocation5], 256
        $region92: #{tpu_custom_call.1} parent=47 // pred_fallthru
          _
      $region48: #{tpu_custom_call.1} parent=5 // pred_fallthru
        _
      %p1041 = scmp.le.s32.totalorder 2, %s20
      // Predicated region
      $region93: #{tpu_custom_call.1} parent=5 // pred_check
        %p1042 = pneg %p1041
      $region94: #{tpu_custom_call.1} parent=5 // pred_check_branch
        %1044 = sbr.rel (%p1042) target = $region96
      $region95: #{tpu_custom_call.1} parent=5 // pred_region
        %s1045 = ssub.s32 %s20, 2
      $region96: #{tpu_custom_call.1} parent=5 // pred_fallthru
        _
    $region6: #{tpu_custom_call.1} parent=1 // loop_footer
      %s24 = sadd.s32 1, %s20
    $region7: #{tpu_custom_call.1} parent=1 // loop_footer_branch
      %19 = sbr.rel target = $region3
    $region8: #{tpu_custom_call.1} parent=1 // loop_exit
      _
    %1046 = vsyncpa [#allocation4], 1
    %s1047 = scalar_lea.sflag [#allocation4], 1
    %1048 = vsyncpa %s1047, 1
    %1049 = vsyncpa [#allocation7], 1
    %1050 = vsyncpa [#allocation10], 1
    %s1051 = scalar_lea.sflag [#allocation10], 1
    %1052 = vsyncpa %s1051, 1
    %1053 = vsyncpa [#allocation13], 1
    %1054 = vsyncpa [#allocation5], 1
    %s1055 = scalar_lea.sflag [#allocation5], 1
    %1056 = vsyncpa %s1055, 1

</llo_original>
